<compile_context>
chip_gen: v5e
topology: v5e:2x2
jax: 0.10.0
libtpu: 0.0.40
codegen_flags: <defaults>
</compile_context>

<pallas_src>
import numpy as np
import jax
import jax.numpy as jnp
from jax.experimental import pallas as pl
from jax.experimental.pallas import tpu as pltpu


# Original hidden sizes and their lane-padded (multiple-of-128) versions.
FCS1_UNITS = 400
FC2_UNITS = 300
FCS1_PAD = 512
FC2_PAD = 384


def critic_kernel(state_ref, action_ref,
                  w1_ref, b1_ref,
                  w2s_ref, w2a_ref, b2_ref,
                  w3_ref, b3_ref,
                  out_ref):
    # ---- fcs1 + ReLU : bf16 MXU operands, f32 accumulation -----------------
    s = state_ref[...].astype(jnp.bfloat16)
    a = action_ref[...].astype(jnp.bfloat16)
    xs = jnp.dot(s, w1_ref[...], preferred_element_type=jnp.float32) + b1_ref[...]
    xs = jnp.maximum(xs, 0.0)

    # ---- fc2 over cat(xs, action): split matmul (no in-kernel concat) ------
    h = (jnp.dot(xs.astype(jnp.bfloat16), w2s_ref[...],
                 preferred_element_type=jnp.float32)
         + jnp.dot(a, w2a_ref[...], preferred_element_type=jnp.float32)
         + b2_ref[...])
    h = jnp.maximum(h, 0.0)

    # ---- fc3 head (out_features == 1), lane-dense output -------------------
    # Per-row dot with the zero-padded w3 row:
    #   1) VPU multiply, then fold the H2 lanes down to 128 using static
    #      128-aligned slices (pure VPU adds),
    #   2) one fully (8,128)-aligned XLU transpose of the (TB,128) partials,
    #   3) sublane reduction -> (1, TB) lane-major row: dense vector stores and
    #      a contiguous output DMA instead of 1-valid-lane masked stores.
    hw = h * w3_ref[...]                            # (TB, H2) f32
    n_chunks = w3_ref.shape[1] // 128               # H2 is a multiple of 128
    p = hw[:, 0:128]
    for c in range(1, n_chunks):
        p = p + hw[:, c * 128:(c + 1) * 128]        # (TB, 128)
    q = jnp.sum(p.T, axis=0, keepdims=True) + b3_ref[0, 0]   # (1, TB)
    out_ref[...] = q.astype(out_ref.dtype)


def _round_up(x, m):
    return (x + m - 1) // m * m


def critic_forward(state, action, params, *, block_b=1024):
    """Q(state, action) for a batch. Returns (B, 1) float32.

    block_b: batch tile (rounded to a multiple of 128).  1024 is a good
    default everywhere; cap at ~2048 on v7x (64 MiB VMEM).
    """
    w1, b1, w2s, w2a, b2, w3, b3 = params
    B, S = state.shape
    A = action.shape[1]
    H1 = w1.shape[1]
    H2 = w2s.shape[1]
    assert H1 % 128 == 0 and H2 % 128 == 0, "hidden dims must be lane-padded"

    block_b = max(128, _round_up(block_b, 128))
    if B >= block_b:
        # Large batch: no wrapper pad (saves an HBM round trip); Pallas masks
        # the ragged last block, its rows land in output columns we slice off.
        TB = block_b
    else:
        # Small batch: one 128-aligned tile; pad the (tiny) inputs so block
        # shapes never exceed array shapes.
        TB = _round_up(B, 128)
        if TB != B:
            pad = TB - B
            state = jnp.pad(state, ((0, pad), (0, 0)))
            action = jnp.pad(action, ((0, pad), (0, 0)))

    num_tiles = pl.cdiv(B, TB)
    grid = (num_tiles,)
    const = lambda i: (0, 0)          # weights stay resident across batch tiles

    out = pl.pallas_call(
        critic_kernel,
        out_shape=jax.ShapeDtypeStruct((1, num_tiles * TB), jnp.float32),
        grid=grid,
        in_specs=[
            pl.BlockSpec((TB, S), lambda i: (i, 0)),            # state (batch-tiled)
            pl.BlockSpec((TB, A), lambda i: (i, 0)),            # action (batch-tiled)
            pl.BlockSpec((S, H1), const),                       # w1   (bf16, resident)
            pl.BlockSpec((1, H1), const),                       # b1   (f32)
            pl.BlockSpec((H1, H2), const),                      # w2 xs-part (bf16)
            pl.BlockSpec((A, H2), const),                       # w2 action-part (bf16)
            pl.BlockSpec((1, H2), const),                       # b2   (f32)
            pl.BlockSpec((1, H2), const),                       # w3 row (f32)
            pl.BlockSpec(memory_space=pltpu.MemorySpace.SMEM),  # b3 scalar
        ],
        out_specs=pl.BlockSpec((1, TB), lambda i: (0, i)),      # lane-dense rows
        compiler_params=pltpu.CompilerParams(
            dimension_semantics=("parallel",),
            vmem_limit_bytes=48 * 1024 * 1024),
    )(state, action, w1, b1, w2s, w2a, b2, w3, b3)

    return out.reshape(-1)[:B].reshape(B, 1)


def init_params(key, state_size, action_size,
                fcs1_units=FCS1_UNITS, fc2_units=FC2_UNITS,
                fcs1_pad=FCS1_PAD, fc2_pad=FC2_PAD):
    """Init matching Critic.reset_parameters ranges, with zero-padded hidden dims.

    Note: hidden_init uses weight.size()[0] (== out_features) as 'fan_in',
    reproducing the original module's behavior (deliberate, do not 'fix').
    Weights are stored (in_features, out_features); MXU operands in bf16.
    """
    k = jax.random.split(key, 6)
    lim1 = 1.0 / np.sqrt(fcs1_units)
    lim2 = 1.0 / np.sqrt(fc2_units)
    lim3 = 0.003
    blim1 = 1.0 / np.sqrt(state_size)
    blim2 = 1.0 / np.sqrt(fcs1_units + action_size)
    blim3 = 1.0 / np.sqrt(fc2_units)

    w1 = jax.random.uniform(k[0], (state_size, fcs1_units), jnp.float32, -lim1, lim1)
    b1 = jax.random.uniform(k[1], (1, fcs1_units), jnp.float32, -blim1, blim1)
    w2 = jax.random.uniform(k[2], (fcs1_units + action_size, fc2_units),
                            jnp.float32, -lim2, lim2)
    b2 = jax.random.uniform(k[3], (1, fc2_units), jnp.float32, -blim2, blim2)
    w3 = jax.random.uniform(k[4], (1, fc2_units), jnp.float32, -lim3, lim3)
    b3 = jax.random.uniform(k[5], (1, 1), jnp.float32, -blim3, blim3)

    # Zero-pad hidden dims to lane multiples of 128.  Padded lanes/rows are
    # zero, so they contribute exactly 0 through ReLU and the fc3 reduction.
    w1p = jnp.zeros((state_size, fcs1_pad), jnp.float32).at[:, :fcs1_units].set(w1)
    b1p = jnp.zeros((1, fcs1_pad), jnp.float32).at[:, :fcs1_units].set(b1)
    w2s = jnp.zeros((fcs1_pad, fc2_pad), jnp.float32).at[:fcs1_units, :fc2_units].set(
        w2[:fcs1_units])
    w2a = jnp.zeros((action_size, fc2_pad), jnp.float32).at[:, :fc2_units].set(
        w2[fcs1_units:])
    b2p = jnp.zeros((1, fc2_pad), jnp.float32).at[:, :fc2_units].set(b2)
    w3p = jnp.zeros((1, fc2_pad), jnp.float32).at[:, :fc2_units].set(w3)

    # bf16 storage for MXU operands; biases / w3 / b3 stay f32.
    # TODO(synk): optional fp8 (v7x) / int8 (v6e) storage of w2s if the critic
    # tolerates the quantization error.
    return (w1p.astype(jnp.bfloat16), b1p,
            w2s.astype(jnp.bfloat16), w2a.astype(jnp.bfloat16), b2p,
            w3p, b3)


def critic_reference(state, action, params):
    """Pure-JAX reference emulating the kernel's bf16-operand / f32-accum math."""
    w1, b1, w2s, w2a, b2, w3, b3 = params
    s = state.astype(jnp.bfloat16).astype(jnp.float32)
    a = action.astype(jnp.bfloat16).astype(jnp.float32)
    w1f = w1.astype(jnp.float32)
    w2sf = w2s.astype(jnp.float32)
    w2af = w2a.astype(jnp.float32)
    xs = jnp.maximum(s @ w1f + b1, 0.0)
    xsb = xs.astype(jnp.bfloat16).astype(jnp.float32)
    h = jnp.maximum(xsb @ w2sf + a @ w2af + b2, 0.0)
    return jnp.sum(h * w3, axis=-1, keepdims=True) + b3[0, 0]


if __name__ == "__main__":
    key = jax.random.PRNGKey(0)
    kp, ks, ka = jax.random.split(key, 3)

    state_size = 16
    action_size = 4
    params = init_params(kp, state_size, action_size)

    # Small demo batch (single padded tile path).
    B = 8
    state = jax.random.normal(ks, (B, state_size), jnp.float32)
    action = jax.random.normal(ka, (B, action_size), jnp.float32)

    out = critic_forward(state, action, params)
    out = jax.block_until_ready(out)
    ref = critic_reference(state, action, params)
    assert out.shape == (B, 1)
    np.testing.assert_allclose(np.asarray(out), np.asarray(ref), rtol=2e-3, atol=2e-3)

    # Multi-tile / ragged-edge path (no wrapper pad; last block is partial).
    B2 = 300
    state2 = jax.random.normal(ks, (B2, state_size), jnp.float32)
    action2 = jax.random.normal(ka, (B2, action_size), jnp.float32)
    out2 = critic_forward(state2, action2, params, block_b=128)
    out2 = jax.block_until_ready(out2)
    ref2 = critic_reference(state2, action2, params)
    assert out2.shape == (B2, 1)
    np.testing.assert_allclose(np.asarray(out2), np.asarray(ref2), rtol=2e-3, atol=2e-3)

    print("KERNEL_OK")
</pallas_src>

<mosaic_0001>
module attributes {stable_mosaic.version = 11 : i64} {
  func.func @critic_kernel(%arg0: i32, %arg1: memref<128x16xf32, #tpu.memory_space<vmem>>, %arg2: memref<128x4xf32, #tpu.memory_space<vmem>>, %arg3: memref<16x512xbf16, #tpu.memory_space<vmem>>, %arg4: memref<1x512xf32, #tpu.memory_space<vmem>>, %arg5: memref<512x384xbf16, #tpu.memory_space<vmem>>, %arg6: memref<4x384xbf16, #tpu.memory_space<vmem>>, %arg7: memref<1x384xf32, #tpu.memory_space<vmem>>, %arg8: memref<1x384xf32, #tpu.memory_space<vmem>>, %arg9: memref<1x1xf32, #tpu.memory_space<smem>>, %arg10: memref<1x128xf32, #tpu.memory_space<vmem>>) attributes {dimension_semantics = [#tpu.dimension_semantics<parallel>], iteration_bounds = array<i64: 1>, scalar_prefetch = 0 : i64, scratch_operands = 0 : i64, tpu.core_type = #tpu.core_type<tc>, window_params = [{transform_indices = @transform_0, window_bounds = array<i64: 128, 16>}, {transform_indices = @transform_1, window_bounds = array<i64: 128, 4>}, {pipeline_mode = #tpu.pipeline_mode<synchronous>, transform_indices = @transform_2, window_bounds = array<i64: 16, 512>}, {pipeline_mode = #tpu.pipeline_mode<synchronous>, transform_indices = @transform_3, window_bounds = array<i64: 1, 512>}, {pipeline_mode = #tpu.pipeline_mode<synchronous>, transform_indices = @transform_4, window_bounds = array<i64: 512, 384>}, {pipeline_mode = #tpu.pipeline_mode<synchronous>, transform_indices = @transform_5, window_bounds = array<i64: 4, 384>}, {pipeline_mode = #tpu.pipeline_mode<synchronous>, transform_indices = @transform_6, window_bounds = array<i64: 1, 384>}, {pipeline_mode = #tpu.pipeline_mode<synchronous>, transform_indices = @transform_7, window_bounds = array<i64: 1, 384>}, {transform_indices = @transform_8, window_bounds = array<i64: 1, 1>}, {transform_indices = @transform_9, window_bounds = array<i64: 1, 128>}]} {
    %c0 = arith.constant 0 : index
    %c0_0 = arith.constant 0 : index
    %0 = vector.load %arg1[%c0, %c0_0] : memref<128x16xf32, #tpu.memory_space<vmem>>, vector<128x16xf32>
    %1 = arith.truncf %0 : vector<128x16xf32> to vector<128x16xbf16>
    %c0_1 = arith.constant 0 : index
    %c0_2 = arith.constant 0 : index
    %2 = vector.load %arg2[%c0_1, %c0_2] : memref<128x4xf32, #tpu.memory_space<vmem>>, vector<128x4xf32>
    %3 = arith.truncf %2 : vector<128x4xf32> to vector<128x4xbf16>
    %c0_3 = arith.constant 0 : index
    %c0_4 = arith.constant 0 : index
    %4 = vector.load %arg3[%c0_3, %c0_4] : memref<16x512xbf16, #tpu.memory_space<vmem>>, vector<16x512xbf16>
    %cst = arith.constant dense<0.000000e+00> : vector<128x512xf32>
    %5 = tpu.matmul %1, %4, %cst {dimension_numbers = #tpu.dot_dimension_numbers<[1], [0], [0], [1], [0, 0, 1, 1], [], []>} : vector<128x16xbf16>, vector<16x512xbf16>, vector<128x512xf32> -> vector<128x512xf32>
    %c0_5 = arith.constant 0 : index
    %c0_6 = arith.constant 0 : index
    %6 = vector.load %arg4[%c0_5, %c0_6] : memref<1x512xf32, #tpu.memory_space<vmem>>, vector<1x512xf32>
    %7 = vector.broadcast %6 : vector<1x512xf32> to vector<128x512xf32>
    %8 = arith.addf %5, %7 : vector<128x512xf32>
    %cst_7 = arith.constant 0.000000e+00 : f32
    %9 = vector.broadcast %cst_7 : f32 to vector<128x512xf32>
    %10 = arith.maximumf %8, %9 : vector<128x512xf32>
    %11 = arith.truncf %10 : vector<128x512xf32> to vector<128x512xbf16>
    %c0_8 = arith.constant 0 : index
    %c0_9 = arith.constant 0 : index
    %12 = vector.load %arg5[%c0_8, %c0_9] : memref<512x384xbf16, #tpu.memory_space<vmem>>, vector<512x384xbf16>
    %cst_10 = arith.constant dense<0.000000e+00> : vector<128x384xf32>
    %13 = tpu.matmul %11, %12, %cst_10 {dimension_numbers = #tpu.dot_dimension_numbers<[1], [0], [0], [1], [0, 0, 1, 1], [], []>} : vector<128x512xbf16>, vector<512x384xbf16>, vector<128x384xf32> -> vector<128x384xf32>
    %c0_11 = arith.constant 0 : index
    %c0_12 = arith.constant 0 : index
    %14 = vector.load %arg6[%c0_11, %c0_12] : memref<4x384xbf16, #tpu.memory_space<vmem>>, vector<4x384xbf16>
    %cst_13 = arith.constant dense<0.000000e+00> : vector<128x384xf32>
    %15 = tpu.matmul %3, %14, %cst_13 {dimension_numbers = #tpu.dot_dimension_numbers<[1], [0], [0], [1], [0, 0, 1, 1], [], []>} : vector<128x4xbf16>, vector<4x384xbf16>, vector<128x384xf32> -> vector<128x384xf32>
    %16 = arith.addf %13, %15 : vector<128x384xf32>
    %c0_14 = arith.constant 0 : index
    %c0_15 = arith.constant 0 : index
    %17 = vector.load %arg7[%c0_14, %c0_15] : memref<1x384xf32, #tpu.memory_space<vmem>>, vector<1x384xf32>
    %18 = vector.broadcast %17 : vector<1x384xf32> to vector<128x384xf32>
    %19 = arith.addf %16, %18 : vector<128x384xf32>
    %cst_16 = arith.constant 0.000000e+00 : f32
    %20 = vector.broadcast %cst_16 : f32 to vector<128x384xf32>
    %21 = arith.maximumf %19, %20 : vector<128x384xf32>
    %c0_17 = arith.constant 0 : index
    %c0_18 = arith.constant 0 : index
    %22 = vector.load %arg8[%c0_17, %c0_18] : memref<1x384xf32, #tpu.memory_space<vmem>>, vector<1x384xf32>
    %23 = vector.broadcast %22 : vector<1x384xf32> to vector<128x384xf32>
    %24 = arith.mulf %21, %23 : vector<128x384xf32>
    %25 = vector.extract_strided_slice %24 {offsets = [0, 0], sizes = [128, 128], strides = [1, 1]} : vector<128x384xf32> to vector<128x128xf32>
    %26 = vector.extract_strided_slice %24 {offsets = [0, 128], sizes = [128, 128], strides = [1, 1]} : vector<128x384xf32> to vector<128x128xf32>
    %27 = arith.addf %25, %26 : vector<128x128xf32>
    %28 = vector.extract_strided_slice %24 {offsets = [0, 256], sizes = [128, 128], strides = [1, 1]} : vector<128x384xf32> to vector<128x128xf32>
    %29 = arith.addf %27, %28 : vector<128x128xf32>
    %30 = tpu.transpose %29, [1, 0] : vector<128x128xf32> -> vector<128x128xf32>
    %cst_19 = arith.constant dense<0.000000e+00> : vector<128xf32>
    %31 = vector.multi_reduction <add>, %30, %cst_19 [0] : vector<128x128xf32> to vector<128xf32>
    %32 = vector.shape_cast %31 : vector<128xf32> to vector<1x128xf32>
    %c0_20 = arith.constant 0 : index
    %c0_21 = arith.constant 0 : index
    %33 = memref.load %arg9[%c0_20, %c0_21] : memref<1x1xf32, #tpu.memory_space<smem>>
    %34 = vector.broadcast %33 : f32 to vector<1x128xf32>
    %35 = arith.addf %32, %34 : vector<1x128xf32>
    %c0_22 = arith.constant 0 : index
    %c0_23 = arith.constant 0 : index
    %36 = vector.load %arg10[%c0_22, %c0_23] : memref<1x128xf32, #tpu.memory_space<vmem>>, vector<1x128xf32>
    tpu.vector_store %arg10[%c0_22, %c0_23], %35 {strides = array<i32>} : memref<1x128xf32, #tpu.memory_space<vmem>>, vector<1x128xf32>,
    return
  }
  func.func @transform_0(%arg0: i32) -> (i32, i32) {
    %c0_i32 = arith.constant 0 : i32
    %c0_i32_0 = arith.constant 0 : i32
    return %arg0, %c0_i32 : i32, i32
  }
  func.func @transform_1(%arg0: i32) -> (i32, i32) {
    %c0_i32 = arith.constant 0 : i32
    %c0_i32_0 = arith.constant 0 : i32
    return %arg0, %c0_i32 : i32, i32
  }
  func.func @transform_2(%arg0: i32) -> (i32, i32) {
    %c0_i32 = arith.constant 0 : i32
    %c0_i32_0 = arith.constant 0 : i32
    %c0_i32_1 = arith.constant 0 : i32
    return %c0_i32, %c0_i32_0 : i32, i32
  }
  func.func @transform_3(%arg0: i32) -> (i32, i32) {
    %c0_i32 = arith.constant 0 : i32
    %c0_i32_0 = arith.constant 0 : i32
    %c0_i32_1 = arith.constant 0 : i32
    return %c0_i32, %c0_i32_0 : i32, i32
  }
  func.func @transform_4(%arg0: i32) -> (i32, i32) {
    %c0_i32 = arith.constant 0 : i32
    %c0_i32_0 = arith.constant 0 : i32
    %c0_i32_1 = arith.constant 0 : i32
    return %c0_i32, %c0_i32_0 : i32, i32
  }
  func.func @transform_5(%arg0: i32) -> (i32, i32) {
    %c0_i32 = arith.constant 0 : i32
    %c0_i32_0 = arith.constant 0 : i32
    %c0_i32_1 = arith.constant 0 : i32
    return %c0_i32, %c0_i32_0 : i32, i32
  }
  func.func @transform_6(%arg0: i32) -> (i32, i32) {
    %c0_i32 = arith.constant 0 : i32
    %c0_i32_0 = arith.constant 0 : i32
    %c0_i32_1 = arith.constant 0 : i32
    return %c0_i32, %c0_i32_0 : i32, i32
  }
  func.func @transform_7(%arg0: i32) -> (i32, i32) {
    %c0_i32 = arith.constant 0 : i32
    %c0_i32_0 = arith.constant 0 : i32
    %c0_i32_1 = arith.constant 0 : i32
    return %c0_i32, %c0_i32_0 : i32, i32
  }
  func.func @transform_8(%arg0: i32) -> (i32, i32) {
    %c0_i32 = arith.constant 0 : i32
    %c0_i32_0 = arith.constant 0 : i32
    %c0_i32_1 = arith.constant 0 : i32
    return %c0_i32, %c0_i32_0 : i32, i32
  }
  func.func @transform_9(%arg0: i32) -> (i32, i32) {
    %c0_i32 = arith.constant 0 : i32
    %c0_i32_0 = arith.constant 0 : i32
    return %c0_i32, %arg0 : i32, i32
  }
}

</mosaic_0001>

<llo_original>
// kernel: tpu_custom_call.1
$region0: #{tpu_custom_call.1}
  #allocation0 [shape = 'u32[]', space=smem, size = 0x4, offset = 0x4, fixed_abs, tag = 'smem constant byte address 0x4 - core index']
  #allocation1 [shape = 'u32[72,128]{1,0:T(1,128)}', space=vmem, size = 0x9000, scoped, tag = 'internal scratch']
  #allocation2 [shape = 'f32[1,1]{1,0:T(1,128)S(6)}', space=smem, size = 0x200, scoped, tag = 'scoped memory for tpu_custom_call.1']
  %s0 = inlined_call_operand.vmem [shape: f32[128,16], index: 0, kind: input, shape index: {}]
  %s1 = inlined_call_operand.vmem [shape: f32[128,4], index: 1, kind: input, shape index: {}]
  %s2 = inlined_call_operand.vmem [shape: bf16[16,512], index: 2, kind: input, shape index: {}]
  %s3 = inlined_call_operand.vmem [shape: f32[1,512], index: 3, kind: input, shape index: {}]
  %s4 = inlined_call_operand.hbm [shape: bf16[512,384], index: 4, kind: input, shape index: {}]
  %s5 = inlined_call_operand.vmem [shape: bf16[4,384], index: 5, kind: input, shape index: {}]
  %s6 = inlined_call_operand.vmem [shape: f32[1,384], index: 6, kind: input, shape index: {}]
  %s7 = inlined_call_operand.vmem [shape: f32[1,384], index: 7, kind: input, shape index: {}]
  %s8 = inlined_call_operand.<no memory space> [shape: f32[1,1], index: 8, kind: input, shape index: {}]
  %s9 = inlined_call_operand.hbm [shape: f32[1,128], index: 9, kind: output, shape index: {}]
  %s10 = sld [smem:[#allocation0]]
  $region50: #{tpu_custom_call.1} parent=0
    _
  %s12 = ssub.s32 1, %s10
  %s13 = scalar_select 0, %s12, %s10
  %14 = sst [smem:[#allocation2]] %s8
  $region1: #{tpu_custom_call.1} parent=0
    #allocation3 [shape = 'u8[393216]{0}', space=vmem, size = 0x60000, scoped, tag = 'input window, operand 4, single buffered']
    #allocation4 [shape = 's32[1]{0}', space=sflag, size = 0x4, scoped, tag = 'scoped memory for tpu_custom_call.1']
    #allocation5 [shape = 's32[1]{0}', space=sflag, size = 0x4, scoped, tag = 'scoped memory for tpu_custom_call.1']
    #allocation6 [shape = 'u8[512]{0}', space=vmem, size = 0x400, scoped, tag = 'output window, operand 0, single buffered']
    %15 = vsyncpa [#allocation4], 0
    %16 = vsyncpa [#allocation5], 0
    // Predicated region
    $region2: #{tpu_custom_call.1} parent=1 // pred_check
      _
    $region3: #{tpu_custom_call.1} parent=1 // pred_check_branch
      %18 = sbr.rel (0) target = $region5
    $region4: #{tpu_custom_call.1} parent=1 // pred_region
      _
    $region5: #{tpu_custom_call.1} parent=1 // pred_fallthru
      _
    // Predicated region
    $region6: #{tpu_custom_call.1} parent=1 // pred_check
      _
    $region7: #{tpu_custom_call.1} parent=1 // pred_check_branch
      %20 = sbr.rel (0) target = $region9
    $region8: #{tpu_custom_call.1} parent=1 // pred_region
      _
    $region9: #{tpu_custom_call.1} parent=1 // pred_fallthru
      _
    // Predicated region
    $region10: #{tpu_custom_call.1} parent=1 // pred_check
      _
    $region11: #{tpu_custom_call.1} parent=1 // pred_check_branch
      %22 = sbr.rel (0) target = $region13
    $region12: #{tpu_custom_call.1} parent=1 // pred_region
      _
    $region13: #{tpu_custom_call.1} parent=1 // pred_fallthru
      _
    // Predicated region
    $region14: #{tpu_custom_call.1} parent=1 // pred_check
      _
    $region15: #{tpu_custom_call.1} parent=1 // pred_check_branch
      %24 = sbr.rel (0) target = $region17
    $region16: #{tpu_custom_call.1} parent=1 // pred_region
      _
    $region17: #{tpu_custom_call.1} parent=1 // pred_fallthru
      _
    // Predicated region
    $region18: #{tpu_custom_call.1} parent=1 // pred_check
      _
    $region19: #{tpu_custom_call.1} parent=1 // pred_check_branch
      %26 = sbr.rel (0) target = $region21
    $region20: #{tpu_custom_call.1} parent=1 // pred_region
      %28 = vsyncadd [#allocation4], 0
      %s29 = sshll.u32 %s4, 4
      %s30 = int_to_ptr.hbm [resolvable:$true] %s29
      %s31 = sshll.u32 [#allocation3], 4
      %s32 = int_to_ptr.vmem [resolvable:$true] %s31
      %37 = dma.hbm_to_vmem [thread:$0]  %s30, 12288, %s32, [#allocation4], 192, 192, 12
    $region21: #{tpu_custom_call.1} parent=1 // pred_fallthru
      _
    // Predicated region
    $region22: #{tpu_custom_call.1} parent=1 // pred_check
      _
    $region23: #{tpu_custom_call.1} parent=1 // pred_check_branch
      %39 = sbr.rel (0) target = $region25
    $region24: #{tpu_custom_call.1} parent=1 // pred_region
      _
    $region25: #{tpu_custom_call.1} parent=1 // pred_fallthru
      _
    // Predicated region
    $region26: #{tpu_custom_call.1} parent=1 // pred_check
      _
    $region27: #{tpu_custom_call.1} parent=1 // pred_check_branch
      %41 = sbr.rel (0) target = $region29
    $region28: #{tpu_custom_call.1} parent=1 // pred_region
      _
    $region29: #{tpu_custom_call.1} parent=1 // pred_fallthru
      _
    // Predicated region
    $region30: #{tpu_custom_call.1} parent=1 // pred_check
      _
    $region31: #{tpu_custom_call.1} parent=1 // pred_check_branch
      %43 = sbr.rel (0) target = $region33
    $region32: #{tpu_custom_call.1} parent=1 // pred_region
      _
    $region33: #{tpu_custom_call.1} parent=1 // pred_fallthru
      _
    // Predicated region
    $region34: #{tpu_custom_call.1} parent=1 // pred_check
      _
    $region35: #{tpu_custom_call.1} parent=1 // pred_check_branch
      %45 = sbr.rel (0) target = $region37
    $region36: #{tpu_custom_call.1} parent=1 // pred_region
      _
    $region37: #{tpu_custom_call.1} parent=1 // pred_fallthru
      _
    // Predicated region
    $region38: #{tpu_custom_call.1} parent=1 // pred_check
      _
    $region39: #{tpu_custom_call.1} parent=1 // pred_check_branch
      %47 = sbr.rel (0) target = $region41
    $region40: #{tpu_custom_call.1} parent=1 // pred_region
      %49 = dma.done [#allocation4], 12288
    $region41: #{tpu_custom_call.1} parent=1 // pred_fallthru
      _
    %v51 = vld [vmem:[%s0] sm:$0xff]
    %v52 = vld [vmem:[%s0 + $0x8] sm:$0xff]
    %v53 = vld [vmem:[%s0 + $0x10] sm:$0xff]
    %v54 = vld [vmem:[%s0 + $0x18] sm:$0xff]
    %v55 = vld [vmem:[%s0 + $0x20] sm:$0xff]
    %v56 = vld [vmem:[%s0 + $0x28] sm:$0xff]
    %v57 = vld [vmem:[%s0 + $0x30] sm:$0xff]
    %v58 = vld [vmem:[%s0 + $0x38] sm:$0xff]
    %v59 = vld [vmem:[%s0 + $0x40] sm:$0xff]
    %v60 = vld [vmem:[%s0 + $0x48] sm:$0xff]
    %v61 = vld [vmem:[%s0 + $0x50] sm:$0xff]
    %v62 = vld [vmem:[%s0 + $0x58] sm:$0xff]
    %v63 = vld [vmem:[%s0 + $0x60] sm:$0xff]
    %v64 = vld [vmem:[%s0 + $0x68] sm:$0xff]
    %v65 = vld [vmem:[%s0 + $0x70] sm:$0xff]
    %v66 = vld [vmem:[%s0 + $0x78] sm:$0xff]
    %v67 = vpack.c.bf16 %v52, %v51
    %v68 = vpack.c.bf16 %v54, %v53
    %v69 = vpack.c.bf16 %v56, %v55
    %v70 = vpack.c.bf16 %v58, %v57
    %v71 = vpack.c.bf16 %v60, %v59
    %v72 = vpack.c.bf16 %v62, %v61
    %v73 = vpack.c.bf16 %v64, %v63
    %v74 = vpack.c.bf16 %v66, %v65
    %v75 = vld [vmem:[%s1] sm:$0xff]
    %v76 = vld [vmem:[%s1 + $0x8] sm:$0xff]
    %v77 = vld [vmem:[%s1 + $0x10] sm:$0xff]
    %v78 = vld [vmem:[%s1 + $0x18] sm:$0xff]
    %v79 = vld [vmem:[%s1 + $0x20] sm:$0xff]
    %v80 = vld [vmem:[%s1 + $0x28] sm:$0xff]
    %v81 = vld [vmem:[%s1 + $0x30] sm:$0xff]
    %v82 = vld [vmem:[%s1 + $0x38] sm:$0xff]
    %v83 = vld [vmem:[%s1 + $0x40] sm:$0xff]
    %v84 = vld [vmem:[%s1 + $0x48] sm:$0xff]
    %v85 = vld [vmem:[%s1 + $0x50] sm:$0xff]
    %v86 = vld [vmem:[%s1 + $0x58] sm:$0xff]
    %v87 = vld [vmem:[%s1 + $0x60] sm:$0xff]
    %v88 = vld [vmem:[%s1 + $0x68] sm:$0xff]
    %v89 = vld [vmem:[%s1 + $0x70] sm:$0xff]
    %v90 = vld [vmem:[%s1 + $0x78] sm:$0xff]
    %v91 = vpack.c.bf16 %v76, %v75
    %v92 = vpack.c.bf16 %v78, %v77
    %v93 = vpack.c.bf16 %v80, %v79
    %v94 = vpack.c.bf16 %v82, %v81
    %v95 = vpack.c.bf16 %v84, %v83
    %v96 = vpack.c.bf16 %v86, %v85
    %v97 = vpack.c.bf16 %v88, %v87
    %v98 = vpack.c.bf16 %v90, %v89
    %v99 = vld [vmem:[%s2] sm:$0xff]
    %v100 = vld [vmem:[%s2 + $0x8] sm:$0xff]
    %v101 = vld [vmem:[%s2 + $0x10] sm:$0xff]
    %v102 = vld [vmem:[%s2 + $0x18] sm:$0xff]
    %v103 = vld [vmem:[%s3] sm:$0xf]
    %v105 = vperm.slane %v103, 0
    %v106 = vperm.slane %v103, 1
    %v107 = vperm.slane %v103, 2
    %v108 = vperm.slane %v103, 3
    %v117 = vunpack.c.l.b16 %v99
    %v118 = vunpack.c.h.b16 %v99
    %v119 = vunpack.c.l.b16 %v100
    %v120 = vunpack.c.h.b16 %v100
    %v121 = vunpack.c.l.b16 %v101
    %v122 = vunpack.c.h.b16 %v101
    %v123 = vunpack.c.l.b16 %v102
    %v124 = vunpack.c.h.b16 %v102
    %v125 = vpack.c.b16 %v121, %v117
    %v126 = vpack.c.b16 %v122, %v118
    %v127 = vpack.c.b16 %v123, %v119
    %v128 = vpack.c.b16 %v124, %v120
    %vm133 = vcmask 130048
    %v135 = vsel %vm133, %v67, 0
    %v138 = vsel %vm133, %v68, 0
    %v141 = vsel %vm133, %v69, 0
    %v144 = vsel %vm133, %v70, 0
    %v147 = vsel %vm133, %v71, 0
    %v150 = vsel %vm133, %v72, 0
    %v153 = vsel %vm133, %v73, 0
    %v156 = vsel %vm133, %v74, 0
    %158 = vmatpush.bf16.msra.mxu0 0
    %159 = vmatpush.bf16.msra.mxu0 0
    %160 = vmatpush.bf16.msra.mxu0 0
    %161 = vmatpush.bf16.msra.mxu0 0
    %162 = vmatpush.bf16.msra.mxu0 0
    %163 = vmatpush.bf16.msra.mxu0 0
    %164 = vmatpush.bf16.msra.mxu0 0
    %165 = vmatpush.bf16.msra.mxu0 %v125
    %166 = vmatmul.bf16.gmra.mxu0 %v135
    %v167 = vpop.f32.mrf.mxu0
    %v168 = vadd.f32 %v105, %v167
    %v169 = vpop.f32.mrf.mxu0
    %v170 = vadd.f32 %v105, %v169
    %171 = vmatmul.bf16.gmra.mxu0 %v138
    %v172 = vpop.f32.mrf.mxu0
    %v173 = vadd.f32 %v105, %v172
    %v174 = vpop.f32.mrf.mxu0
    %v175 = vadd.f32 %v105, %v174
    %176 = vmatmul.bf16.gmra.mxu0 %v141
    %v177 = vpop.f32.mrf.mxu0
    %v178 = vadd.f32 %v105, %v177
    %v179 = vpop.f32.mrf.mxu0
    %v180 = vadd.f32 %v105, %v179
    %181 = vmatmul.bf16.gmra.mxu0 %v144
    %v182 = vpop.f32.mrf.mxu0
    %v183 = vadd.f32 %v105, %v182
    %v184 = vpop.f32.mrf.mxu0
    %v185 = vadd.f32 %v105, %v184
    %186 = vmatmul.bf16.gmra.mxu0 %v147
    %v187 = vpop.f32.mrf.mxu0
    %v188 = vadd.f32 %v105, %v187
    %v189 = vpop.f32.mrf.mxu0
    %v190 = vadd.f32 %v105, %v189
    %191 = vmatmul.bf16.gmra.mxu0 %v150
    %v192 = vpop.f32.mrf.mxu0
    %v193 = vadd.f32 %v105, %v192
    %v194 = vpop.f32.mrf.mxu0
    %v195 = vadd.f32 %v105, %v194
    %196 = vmatmul.bf16.gmra.mxu0 %v153
    %v197 = vpop.f32.mrf.mxu0
    %v198 = vadd.f32 %v105, %v197
    %v199 = vpop.f32.mrf.mxu0
    %v200 = vadd.f32 %v105, %v199
    %201 = vmatmul.bf16.gmra.mxu0 %v156
    %v202 = vpop.f32.mrf.mxu0
    %v203 = vadd.f32 %v105, %v202
    %v204 = vpop.f32.mrf.mxu0
    %v205 = vadd.f32 %v105, %v204
    %206 = vdwg.mxu0
    %207 = vmatpush.bf16.msra.mxu0 0
    %208 = vmatpush.bf16.msra.mxu0 0
    %209 = vmatpush.bf16.msra.mxu0 0
    %210 = vmatpush.bf16.msra.mxu0 0
    %211 = vmatpush.bf16.msra.mxu0 0
    %212 = vmatpush.bf16.msra.mxu0 0
    %213 = vmatpush.bf16.msra.mxu0 0
    %214 = vmatpush.bf16.msra.mxu0 %v126
    %215 = vmatmul.bf16.gmra.mxu0 %v135
    %v216 = vpop.f32.mrf.mxu0
    %v217 = vadd.f32 %v106, %v216
    %v218 = vpop.f32.mrf.mxu0
    %v219 = vadd.f32 %v106, %v218
    %220 = vmatmul.bf16.gmra.mxu0 %v138
    %v221 = vpop.f32.mrf.mxu0
    %v222 = vadd.f32 %v106, %v221
    %v223 = vpop.f32.mrf.mxu0
    %v224 = vadd.f32 %v106, %v223
    %225 = vmatmul.bf16.gmra.mxu0 %v141
    %v226 = vpop.f32.mrf.mxu0
    %v227 = vadd.f32 %v106, %v226
    %v228 = vpop.f32.mrf.mxu0
    %v229 = vadd.f32 %v106, %v228
    %230 = vmatmul.bf16.gmra.mxu0 %v144
    %v231 = vpop.f32.mrf.mxu0
    %v232 = vadd.f32 %v106, %v231
    %v233 = vpop.f32.mrf.mxu0
    %v234 = vadd.f32 %v106, %v233
    %235 = vmatmul.bf16.gmra.mxu0 %v147
    %v236 = vpop.f32.mrf.mxu0
    %v237 = vadd.f32 %v106, %v236
    %v238 = vpop.f32.mrf.mxu0
    %v239 = vadd.f32 %v106, %v238
    %240 = vmatmul.bf16.gmra.mxu0 %v150
    %v241 = vpop.f32.mrf.mxu0
    %v242 = vadd.f32 %v106, %v241
    %v243 = vpop.f32.mrf.mxu0
    %v244 = vadd.f32 %v106, %v243
    %245 = vmatmul.bf16.gmra.mxu0 %v153
    %v246 = vpop.f32.mrf.mxu0
    %v247 = vadd.f32 %v106, %v246
    %v248 = vpop.f32.mrf.mxu0
    %v249 = vadd.f32 %v106, %v248
    %250 = vmatmul.bf16.gmra.mxu0 %v156
    %v251 = vpop.f32.mrf.mxu0
    %v252 = vadd.f32 %v106, %v251
    %v253 = vpop.f32.mrf.mxu0
    %v254 = vadd.f32 %v106, %v253
    %255 = vdwg.mxu0
    %256 = vmatpush.bf16.msra.mxu0 0
    %257 = vmatpush.bf16.msra.mxu0 0
    %258 = vmatpush.bf16.msra.mxu0 0
    %259 = vmatpush.bf16.msra.mxu0 0
    %260 = vmatpush.bf16.msra.mxu0 0
    %261 = vmatpush.bf16.msra.mxu0 0
    %262 = vmatpush.bf16.msra.mxu0 0
    %263 = vmatpush.bf16.msra.mxu0 %v127
    %264 = vmatmul.bf16.gmra.mxu0 %v135
    %v265 = vpop.f32.mrf.mxu0
    %v266 = vadd.f32 %v107, %v265
    %v267 = vpop.f32.mrf.mxu0
    %v268 = vadd.f32 %v107, %v267
    %269 = vmatmul.bf16.gmra.mxu0 %v138
    %v270 = vpop.f32.mrf.mxu0
    %v271 = vadd.f32 %v107, %v270
    %v272 = vpop.f32.mrf.mxu0
    %v273 = vadd.f32 %v107, %v272
    %274 = vmatmul.bf16.gmra.mxu0 %v141
    %v275 = vpop.f32.mrf.mxu0
    %v276 = vadd.f32 %v107, %v275
    %v277 = vpop.f32.mrf.mxu0
    %v278 = vadd.f32 %v107, %v277
    %279 = vmatmul.bf16.gmra.mxu0 %v144
    %v280 = vpop.f32.mrf.mxu0
    %v281 = vadd.f32 %v107, %v280
    %v282 = vpop.f32.mrf.mxu0
    %v283 = vadd.f32 %v107, %v282
    %284 = vmatmul.bf16.gmra.mxu0 %v147
    %v285 = vpop.f32.mrf.mxu0
    %v286 = vadd.f32 %v107, %v285
    %v287 = vpop.f32.mrf.mxu0
    %v288 = vadd.f32 %v107, %v287
    %289 = vmatmul.bf16.gmra.mxu0 %v150
    %v290 = vpop.f32.mrf.mxu0
    %v291 = vadd.f32 %v107, %v290
    %v292 = vpop.f32.mrf.mxu0
    %v293 = vadd.f32 %v107, %v292
    %294 = vmatmul.bf16.gmra.mxu0 %v153
    %v295 = vpop.f32.mrf.mxu0
    %v296 = vadd.f32 %v107, %v295
    %v297 = vpop.f32.mrf.mxu0
    %v298 = vadd.f32 %v107, %v297
    %299 = vmatmul.bf16.gmra.mxu0 %v156
    %v300 = vpop.f32.mrf.mxu0
    %v301 = vadd.f32 %v107, %v300
    %v302 = vpop.f32.mrf.mxu0
    %v303 = vadd.f32 %v107, %v302
    %304 = vdwg.mxu0
    %305 = vmatpush.bf16.msra.mxu0 0
    %306 = vmatpush.bf16.msra.mxu0 0
    %307 = vmatpush.bf16.msra.mxu0 0
    %308 = vmatpush.bf16.msra.mxu0 0
    %309 = vmatpush.bf16.msra.mxu0 0
    %310 = vmatpush.bf16.msra.mxu0 0
    %311 = vmatpush.bf16.msra.mxu0 0
    %312 = vmatpush.bf16.msra.mxu0 %v128
    %313 = vmatmul.bf16.gmra.mxu0 %v135
    %v314 = vpop.f32.mrf.mxu0
    %v315 = vadd.f32 %v108, %v314
    %v316 = vpop.f32.mrf.mxu0
    %v317 = vadd.f32 %v108, %v316
    %318 = vmatmul.bf16.gmra.mxu0 %v138
    %v319 = vpop.f32.mrf.mxu0
    %v320 = vadd.f32 %v108, %v319
    %v321 = vpop.f32.mrf.mxu0
    %v322 = vadd.f32 %v108, %v321
    %323 = vmatmul.bf16.gmra.mxu0 %v141
    %v324 = vpop.f32.mrf.mxu0
    %v325 = vadd.f32 %v108, %v324
    %v326 = vpop.f32.mrf.mxu0
    %v327 = vadd.f32 %v108, %v326
    %328 = vmatmul.bf16.gmra.mxu0 %v144
    %v329 = vpop.f32.mrf.mxu0
    %v330 = vadd.f32 %v108, %v329
    %v331 = vpop.f32.mrf.mxu0
    %v332 = vadd.f32 %v108, %v331
    %333 = vmatmul.bf16.gmra.mxu0 %v147
    %v334 = vpop.f32.mrf.mxu0
    %v335 = vadd.f32 %v108, %v334
    %v336 = vpop.f32.mrf.mxu0
    %v337 = vadd.f32 %v108, %v336
    %338 = vmatmul.bf16.gmra.mxu0 %v150
    %v339 = vpop.f32.mrf.mxu0
    %v340 = vadd.f32 %v108, %v339
    %v341 = vpop.f32.mrf.mxu0
    %v342 = vadd.f32 %v108, %v341
    %343 = vmatmul.bf16.gmra.mxu0 %v153
    %v344 = vpop.f32.mrf.mxu0
    %v345 = vadd.f32 %v108, %v344
    %v346 = vpop.f32.mrf.mxu0
    %v347 = vadd.f32 %v108, %v346
    %348 = vmatmul.bf16.gmra.mxu0 %v156
    %v349 = vpop.f32.mrf.mxu0
    %v350 = vadd.f32 %v108, %v349
    %v351 = vpop.f32.mrf.mxu0
    %v352 = vadd.f32 %v108, %v351
    %353 = vdwg.mxu0
    %v354 = vmax.f32 %v168, 0.0
    %v355 = vmax.f32 %v217, 0.0
    %v356 = vmax.f32 %v266, 0.0
    %v357 = vmax.f32 %v315, 0.0
    %v358 = vmax.f32 %v170, 0.0
    %v359 = vmax.f32 %v219, 0.0
    %v360 = vmax.f32 %v268, 0.0
    %v361 = vmax.f32 %v317, 0.0
    %v362 = vmax.f32 %v173, 0.0
    %v363 = vmax.f32 %v222, 0.0
    %v364 = vmax.f32 %v271, 0.0
    %v365 = vmax.f32 %v320, 0.0
    %v366 = vmax.f32 %v175, 0.0
    %v367 = vmax.f32 %v224, 0.0
    %v368 = vmax.f32 %v273, 0.0
    %v369 = vmax.f32 %v322, 0.0
    %v370 = vmax.f32 %v178, 0.0
    %v371 = vmax.f32 %v227, 0.0
    %v372 = vmax.f32 %v276, 0.0
    %v373 = vmax.f32 %v325, 0.0
    %v374 = vmax.f32 %v180, 0.0
    %v375 = vmax.f32 %v229, 0.0
    %v376 = vmax.f32 %v278, 0.0
    %v377 = vmax.f32 %v327, 0.0
    %v378 = vmax.f32 %v183, 0.0
    %v379 = vmax.f32 %v232, 0.0
    %v380 = vmax.f32 %v281, 0.0
    %v381 = vmax.f32 %v330, 0.0
    %v382 = vmax.f32 %v185, 0.0
    %v383 = vmax.f32 %v234, 0.0
    %v384 = vmax.f32 %v283, 0.0
    %v385 = vmax.f32 %v332, 0.0
    %v386 = vmax.f32 %v188, 0.0
    %v387 = vmax.f32 %v237, 0.0
    %v388 = vmax.f32 %v286, 0.0
    %v389 = vmax.f32 %v335, 0.0
    %v390 = vmax.f32 %v190, 0.0
    %v391 = vmax.f32 %v239, 0.0
    %v392 = vmax.f32 %v288, 0.0
    %v393 = vmax.f32 %v337, 0.0
    %v394 = vmax.f32 %v193, 0.0
    %v395 = vmax.f32 %v242, 0.0
    %v396 = vmax.f32 %v291, 0.0
    %v397 = vmax.f32 %v340, 0.0
    %v398 = vmax.f32 %v195, 0.0
    %v399 = vmax.f32 %v244, 0.0
    %v400 = vmax.f32 %v293, 0.0
    %v401 = vmax.f32 %v342, 0.0
    %v402 = vmax.f32 %v198, 0.0
    %v403 = vmax.f32 %v247, 0.0
    %v404 = vmax.f32 %v296, 0.0
    %v405 = vmax.f32 %v345, 0.0
    %v406 = vmax.f32 %v200, 0.0
    %v407 = vmax.f32 %v249, 0.0
    %v408 = vmax.f32 %v298, 0.0
    %v409 = vmax.f32 %v347, 0.0
    %v410 = vmax.f32 %v203, 0.0
    %v411 = vmax.f32 %v252, 0.0
    %v412 = vmax.f32 %v301, 0.0
    %v413 = vmax.f32 %v350, 0.0
    %v414 = vmax.f32 %v205, 0.0
    %v415 = vmax.f32 %v254, 0.0
    %v416 = vmax.f32 %v303, 0.0
    %v417 = vmax.f32 %v352, 0.0
    %v418 = vpack.c.bf16 %v358, %v354
    %v419 = vpack.c.bf16 %v359, %v355
    %v420 = vpack.c.bf16 %v360, %v356
    %v421 = vpack.c.bf16 %v361, %v357
    %v422 = vpack.c.bf16 %v366, %v362
    %v423 = vpack.c.bf16 %v367, %v363
    %v424 = vpack.c.bf16 %v368, %v364
    %v425 = vpack.c.bf16 %v369, %v365
    %v426 = vpack.c.bf16 %v374, %v370
    %v427 = vpack.c.bf16 %v375, %v371
    %v428 = vpack.c.bf16 %v376, %v372
    %v429 = vpack.c.bf16 %v377, %v373
    %v430 = vpack.c.bf16 %v382, %v378
    %v431 = vpack.c.bf16 %v383, %v379
    %v432 = vpack.c.bf16 %v384, %v380
    %v433 = vpack.c.bf16 %v385, %v381
    %v434 = vpack.c.bf16 %v390, %v386
    %v435 = vpack.c.bf16 %v391, %v387
    %v436 = vpack.c.bf16 %v392, %v388
    %v437 = vpack.c.bf16 %v393, %v389
    %v438 = vpack.c.bf16 %v398, %v394
    %v439 = vpack.c.bf16 %v399, %v395
    %v440 = vpack.c.bf16 %v400, %v396
    %v441 = vpack.c.bf16 %v401, %v397
    %v442 = vpack.c.bf16 %v406, %v402
    %v443 = vpack.c.bf16 %v407, %v403
    %v444 = vpack.c.bf16 %v408, %v404
    %v445 = vpack.c.bf16 %v409, %v405
    %v446 = vpack.c.bf16 %v414, %v410
    %v447 = vpack.c.bf16 %v415, %v411
    %v448 = vpack.c.bf16 %v416, %v412
    %v449 = vpack.c.bf16 %v417, %v413
    %v450 = vld [vmem:[#allocation3] sm:$0xff]
    %v451 = vld [vmem:[#allocation3 + $0x8] sm:$0xf]
    %v452 = vld [vmem:[#allocation3 + $0xc] sm:$0xff]
    %v453 = vld [vmem:[#allocation3 + $0x14] sm:$0xf]
    %v454 = vld [vmem:[#allocation3 + $0x18] sm:$0xff]
    %v455 = vld [vmem:[#allocation3 + $0x20] sm:$0xf]
    %v456 = vld [vmem:[#allocation3 + $0x24] sm:$0xff]
    %v457 = vld [vmem:[#allocation3 + $0x2c] sm:$0xf]
    %v458 = vld [vmem:[#allocation3 + $0x30] sm:$0xff]
    %v459 = vld [vmem:[#allocation3 + $0x38] sm:$0xf]
    %v460 = vld [vmem:[#allocation3 + $0x3c] sm:$0xff]
    %v461 = vld [vmem:[#allocation3 + $0x44] sm:$0xf]
    %v462 = vld [vmem:[#allocation3 + $0x48] sm:$0xff]
    %v463 = vld [vmem:[#allocation3 + $0x50] sm:$0xf]
    %v464 = vld [vmem:[#allocation3 + $0x54] sm:$0xff]
    %v465 = vld [vmem:[#allocation3 + $0x5c] sm:$0xf]
    %v466 = vld [vmem:[#allocation3 + $0x60] sm:$0xff]
    %v467 = vld [vmem:[#allocation3 + $0x68] sm:$0xf]
    %v468 = vld [vmem:[#allocation3 + $0x6c] sm:$0xff]
    %v469 = vld [vmem:[#allocation3 + $0x74] sm:$0xf]
    %v470 = vld [vmem:[#allocation3 + $0x78] sm:$0xff]
    %v471 = vld [vmem:[#allocation3 + $0x80] sm:$0xf]
    %v472 = vld [vmem:[#allocation3 + $0x84] sm:$0xff]
    %v473 = vld [vmem:[#allocation3 + $0x8c] sm:$0xf]
    %v474 = vld [vmem:[#allocation3 + $0x90] sm:$0xff]
    %v475 = vld [vmem:[#allocation3 + $0x98] sm:$0xf]
    %v476 = vld [vmem:[#allocation3 + $0x9c] sm:$0xff]
    %v477 = vld [vmem:[#allocation3 + $0xa4] sm:$0xf]
    %v478 = vld [vmem:[#allocation3 + $0xa8] sm:$0xff]
    %v479 = vld [vmem:[#allocation3 + $0xb0] sm:$0xf]
    %v480 = vld [vmem:[#allocation3 + $0xb4] sm:$0xff]
    %v481 = vld [vmem:[#allocation3 + $0xbc] sm:$0xf]
    %v482 = vld [vmem:[#allocation3 + $0xc0] sm:$0xff]
    %v483 = vld [vmem:[#allocation3 + $0xc8] sm:$0xf]
    %v484 = vld [vmem:[#allocation3 + $0xcc] sm:$0xff]
    %v485 = vld [vmem:[#allocation3 + $0xd4] sm:$0xf]
    %v486 = vld [vmem:[#allocation3 + $0xd8] sm:$0xff]
    %v487 = vld [vmem:[#allocation3 + $0xe0] sm:$0xf]
    %v488 = vld [vmem:[#allocation3 + $0xe4] sm:$0xff]
    %v489 = vld [vmem:[#allocation3 + $0xec] sm:$0xf]
    %v490 = vld [vmem:[#allocation3 + $0xf0] sm:$0xff]
    %v491 = vld [vmem:[#allocation3 + $0xf8] sm:$0xf]
    %v492 = vld [vmem:[#allocation3 + $0xfc] sm:$0xff]
    %v493 = vld [vmem:[#allocation3 + $0x104] sm:$0xf]
    %v494 = vld [vmem:[#allocation3 + $0x108] sm:$0xff]
    %v495 = vld [vmem:[#allocation3 + $0x110] sm:$0xf]
    %v496 = vld [vmem:[#allocation3 + $0x114] sm:$0xff]
    %v497 = vld [vmem:[#allocation3 + $0x11c] sm:$0xf]
    %v498 = vld [vmem:[#allocation3 + $0x120] sm:$0xff]
    %v499 = vld [vmem:[#allocation3 + $0x128] sm:$0xf]
    %v500 = vld [vmem:[#allocation3 + $0x12c] sm:$0xff]
    %v501 = vld [vmem:[#allocation3 + $0x134] sm:$0xf]
    %v502 = vld [vmem:[#allocation3 + $0x138] sm:$0xff]
    %v503 = vld [vmem:[#allocation3 + $0x140] sm:$0xf]
    %v504 = vld [vmem:[#allocation3 + $0x144] sm:$0xff]
    %v505 = vld [vmem:[#allocation3 + $0x14c] sm:$0xf]
    %v506 = vld [vmem:[#allocation3 + $0x150] sm:$0xff]
    %v507 = vld [vmem:[#allocation3 + $0x158] sm:$0xf]
    %v508 = vld [vmem:[#allocation3 + $0x15c] sm:$0xff]
    %v509 = vld [vmem:[#allocation3 + $0x164] sm:$0xf]
    %v510 = vld [vmem:[#allocation3 + $0x168] sm:$0xff]
    %v511 = vld [vmem:[#allocation3 + $0x170] sm:$0xf]
    %v512 = vld [vmem:[#allocation3 + $0x174] sm:$0xff]
    %v513 = vld [vmem:[#allocation3 + $0x17c] sm:$0xf]
    %v514 = vld [vmem:[#allocation3 + $0x180] sm:$0xff]
    %v515 = vld [vmem:[#allocation3 + $0x188] sm:$0xf]
    %v516 = vld [vmem:[#allocation3 + $0x18c] sm:$0xff]
    %v517 = vld [vmem:[#allocation3 + $0x194] sm:$0xf]
    %v518 = vld [vmem:[#allocation3 + $0x198] sm:$0xff]
    %v519 = vld [vmem:[#allocation3 + $0x1a0] sm:$0xf]
    %v520 = vld [vmem:[#allocation3 + $0x1a4] sm:$0xff]
    %v521 = vld [vmem:[#allocation3 + $0x1ac] sm:$0xf]
    %v522 = vld [vmem:[#allocation3 + $0x1b0] sm:$0xff]
    %v523 = vld [vmem:[#allocation3 + $0x1b8] sm:$0xf]
    %v524 = vld [vmem:[#allocation3 + $0x1bc] sm:$0xff]
    %v525 = vld [vmem:[#allocation3 + $0x1c4] sm:$0xf]
    %v526 = vld [vmem:[#allocation3 + $0x1c8] sm:$0xff]
    %v527 = vld [vmem:[#allocation3 + $0x1d0] sm:$0xf]
    %v528 = vld [vmem:[#allocation3 + $0x1d4] sm:$0xff]
    %v529 = vld [vmem:[#allocation3 + $0x1dc] sm:$0xf]
    %v530 = vld [vmem:[#allocation3 + $0x1e0] sm:$0xff]
    %v531 = vld [vmem:[#allocation3 + $0x1e8] sm:$0xf]
    %v532 = vld [vmem:[#allocation3 + $0x1ec] sm:$0xff]
    %v533 = vld [vmem:[#allocation3 + $0x1f4] sm:$0xf]
    %v534 = vld [vmem:[#allocation3 + $0x1f8] sm:$0xff]
    %v535 = vld [vmem:[#allocation3 + $0x200] sm:$0xf]
    %v536 = vld [vmem:[#allocation3 + $0x204] sm:$0xff]
    %v537 = vld [vmem:[#allocation3 + $0x20c] sm:$0xf]
    %v538 = vld [vmem:[#allocation3 + $0x210] sm:$0xff]
    %v539 = vld [vmem:[#allocation3 + $0x218] sm:$0xf]
    %v540 = vld [vmem:[#allocation3 + $0x21c] sm:$0xff]
    %v541 = vld [vmem:[#allocation3 + $0x224] sm:$0xf]
    %v542 = vld [vmem:[#allocation3 + $0x228] sm:$0xff]
    %v543 = vld [vmem:[#allocation3 + $0x230] sm:$0xf]
    %v544 = vld [vmem:[#allocation3 + $0x234] sm:$0xff]
    %v545 = vld [vmem:[#allocation3 + $0x23c] sm:$0xf]
    %v546 = vld [vmem:[#allocation3 + $0x240] sm:$0xff]
    %v547 = vld [vmem:[#allocation3 + $0x248] sm:$0xf]
    %v548 = vld [vmem:[#allocation3 + $0x24c] sm:$0xff]
    %v549 = vld [vmem:[#allocation3 + $0x254] sm:$0xf]
    %v550 = vld [vmem:[#allocation3 + $0x258] sm:$0xff]
    %v551 = vld [vmem:[#allocation3 + $0x260] sm:$0xf]
    %v552 = vld [vmem:[#allocation3 + $0x264] sm:$0xff]
    %v553 = vld [vmem:[#allocation3 + $0x26c] sm:$0xf]
    %v554 = vld [vmem:[#allocation3 + $0x270] sm:$0xff]
    %v555 = vld [vmem:[#allocation3 + $0x278] sm:$0xf]
    %v556 = vld [vmem:[#allocation3 + $0x27c] sm:$0xff]
    %v557 = vld [vmem:[#allocation3 + $0x284] sm:$0xf]
    %v558 = vld [vmem:[#allocation3 + $0x288] sm:$0xff]
    %v559 = vld [vmem:[#allocation3 + $0x290] sm:$0xf]
    %v560 = vld [vmem:[#allocation3 + $0x294] sm:$0xff]
    %v561 = vld [vmem:[#allocation3 + $0x29c] sm:$0xf]
    %v562 = vld [vmem:[#allocation3 + $0x2a0] sm:$0xff]
    %v563 = vld [vmem:[#allocation3 + $0x2a8] sm:$0xf]
    %v564 = vld [vmem:[#allocation3 + $0x2ac] sm:$0xff]
    %v565 = vld [vmem:[#allocation3 + $0x2b4] sm:$0xf]
    %v566 = vld [vmem:[#allocation3 + $0x2b8] sm:$0xff]
    %v567 = vld [vmem:[#allocation3 + $0x2c0] sm:$0xf]
    %v568 = vld [vmem:[#allocation3 + $0x2c4] sm:$0xff]
    %v569 = vld [vmem:[#allocation3 + $0x2cc] sm:$0xf]
    %v570 = vld [vmem:[#allocation3 + $0x2d0] sm:$0xff]
    %v571 = vld [vmem:[#allocation3 + $0x2d8] sm:$0xf]
    %v572 = vld [vmem:[#allocation3 + $0x2dc] sm:$0xff]
    %v573 = vld [vmem:[#allocation3 + $0x2e4] sm:$0xf]
    %v574 = vld [vmem:[#allocation3 + $0x2e8] sm:$0xff]
    %v575 = vld [vmem:[#allocation3 + $0x2f0] sm:$0xf]
    %v576 = vld [vmem:[#allocation3 + $0x2f4] sm:$0xff]
    %v577 = vld [vmem:[#allocation3 + $0x2fc] sm:$0xf]
    %v578 = vld [vmem:[%s5] sm:$0x3f]
    %580 = vst [vmem:[#allocation1] ss:$4 sm:$0xff] %v578
    %v581 = vld.sshfl [vmem:[#allocation1] sm:$0xff pattern:$0x73625140]
    %v582 = vld.sshfl [vmem:[#allocation1 + $0x8] sm:$0xff pattern:$0x73625140]
    %v583 = vld.sshfl [vmem:[#allocation1 + $0x10] sm:$0xff pattern:$0x73625140]
    %vm584 = vcmask 31744
    %v586 = vsel %vm584, %v91, 0
    %v589 = vsel %vm584, %v92, 0
    %v592 = vsel %vm584, %v93, 0
    %v595 = vsel %vm584, %v94, 0
    %v598 = vsel %vm584, %v95, 0
    %v601 = vsel %vm584, %v96, 0
    %v604 = vsel %vm584, %v97, 0
    %v607 = vsel %vm584, %v98, 0
    %vm609 = vcmask 1041408
    %v610 = vsel %vm609, %v581, 0
    %v612 = vsel %vm609, %v582, 0
    %v614 = vsel %vm609, %v583, 0
    %616 = vmatpush.bf16.msra.mxu0 0
    %617 = vmatpush.bf16.msra.mxu0 0
    %618 = vmatpush.bf16.msra.mxu0 0
    %619 = vmatpush.bf16.msra.mxu0 0
    %620 = vmatpush.bf16.msra.mxu0 0
    %621 = vmatpush.bf16.msra.mxu0 0
    %622 = vmatpush.bf16.msra.mxu0 0
    %623 = vmatpush.bf16.msra.mxu0 %v610
    %624 = vmatmul.bf16.gmra.mxu0 %v586
    %v625 = vpop.f32.mrf.mxu0
    %v626 = vadd.f32 0.0, %v625
    %v627 = vpop.f32.mrf.mxu0
    %v628 = vadd.f32 0.0, %v627
    %629 = vmatmul.bf16.gmra.mxu0 %v589
    %v630 = vpop.f32.mrf.mxu0
    %v631 = vadd.f32 0.0, %v630
    %v632 = vpop.f32.mrf.mxu0
    %v633 = vadd.f32 0.0, %v632
    %634 = vmatmul.bf16.gmra.mxu0 %v592
    %v635 = vpop.f32.mrf.mxu0
    %v636 = vadd.f32 0.0, %v635
    %v637 = vpop.f32.mrf.mxu0
    %v638 = vadd.f32 0.0, %v637
    %639 = vmatmul.bf16.gmra.mxu0 %v595
    %v640 = vpop.f32.mrf.mxu0
    %v641 = vadd.f32 0.0, %v640
    %v642 = vpop.f32.mrf.mxu0
    %v643 = vadd.f32 0.0, %v642
    %644 = vmatmul.bf16.gmra.mxu0 %v598
    %v645 = vpop.f32.mrf.mxu0
    %v646 = vadd.f32 0.0, %v645
    %v647 = vpop.f32.mrf.mxu0
    %v648 = vadd.f32 0.0, %v647
    %649 = vmatmul.bf16.gmra.mxu0 %v601
    %v650 = vpop.f32.mrf.mxu0
    %v651 = vadd.f32 0.0, %v650
    %v652 = vpop.f32.mrf.mxu0
    %v653 = vadd.f32 0.0, %v652
    %654 = vmatmul.bf16.gmra.mxu0 %v604
    %v655 = vpop.f32.mrf.mxu0
    %v656 = vadd.f32 0.0, %v655
    %v657 = vpop.f32.mrf.mxu0
    %v658 = vadd.f32 0.0, %v657
    %659 = vmatmul.bf16.gmra.mxu0 %v607
    %v660 = vpop.f32.mrf.mxu0
    %v661 = vadd.f32 0.0, %v660
    %v662 = vpop.f32.mrf.mxu0
    %v663 = vadd.f32 0.0, %v662
    %664 = vdwg.mxu0
    %665 = vmatpush.bf16.msra.mxu0 0
    %666 = vmatpush.bf16.msra.mxu0 0
    %667 = vmatpush.bf16.msra.mxu0 0
    %668 = vmatpush.bf16.msra.mxu0 0
    %669 = vmatpush.bf16.msra.mxu0 0
    %670 = vmatpush.bf16.msra.mxu0 0
    %671 = vmatpush.bf16.msra.mxu0 0
    %672 = vmatpush.bf16.msra.mxu0 %v612
    %673 = vmatmul.bf16.gmra.mxu0 %v586
    %v674 = vpop.f32.mrf.mxu0
    %v675 = vadd.f32 0.0, %v674
    %v676 = vpop.f32.mrf.mxu0
    %v677 = vadd.f32 0.0, %v676
    %678 = vmatmul.bf16.gmra.mxu0 %v589
    %v679 = vpop.f32.mrf.mxu0
    %v680 = vadd.f32 0.0, %v679
    %v681 = vpop.f32.mrf.mxu0
    %v682 = vadd.f32 0.0, %v681
    %683 = vmatmul.bf16.gmra.mxu0 %v592
    %v684 = vpop.f32.mrf.mxu0
    %v685 = vadd.f32 0.0, %v684
    %v686 = vpop.f32.mrf.mxu0
    %v687 = vadd.f32 0.0, %v686
    %688 = vmatmul.bf16.gmra.mxu0 %v595
    %v689 = vpop.f32.mrf.mxu0
    %v690 = vadd.f32 0.0, %v689
    %v691 = vpop.f32.mrf.mxu0
    %v692 = vadd.f32 0.0, %v691
    %693 = vmatmul.bf16.gmra.mxu0 %v598
    %v694 = vpop.f32.mrf.mxu0
    %v695 = vadd.f32 0.0, %v694
    %v696 = vpop.f32.mrf.mxu0
    %v697 = vadd.f32 0.0, %v696
    %698 = vmatmul.bf16.gmra.mxu0 %v601
    %v699 = vpop.f32.mrf.mxu0
    %v700 = vadd.f32 0.0, %v699
    %v701 = vpop.f32.mrf.mxu0
    %v702 = vadd.f32 0.0, %v701
    %703 = vmatmul.bf16.gmra.mxu0 %v604
    %v704 = vpop.f32.mrf.mxu0
    %v705 = vadd.f32 0.0, %v704
    %v706 = vpop.f32.mrf.mxu0
    %v707 = vadd.f32 0.0, %v706
    %708 = vmatmul.bf16.gmra.mxu0 %v607
    %v709 = vpop.f32.mrf.mxu0
    %v710 = vadd.f32 0.0, %v709
    %v711 = vpop.f32.mrf.mxu0
    %v712 = vadd.f32 0.0, %v711
    %713 = vdwg.mxu0
    %714 = vmatpush.bf16.msra.mxu0 0
    %715 = vmatpush.bf16.msra.mxu0 0
    %716 = vmatpush.bf16.msra.mxu0 0
    %717 = vmatpush.bf16.msra.mxu0 0
    %718 = vmatpush.bf16.msra.mxu0 0
    %719 = vmatpush.bf16.msra.mxu0 0
    %720 = vmatpush.bf16.msra.mxu0 0
    %721 = vmatpush.bf16.msra.mxu0 %v614
    %722 = vmatmul.bf16.gmra.mxu0 %v586
    %v723 = vpop.f32.mrf.mxu0
    %v724 = vadd.f32 0.0, %v723
    %v725 = vpop.f32.mrf.mxu0
    %v726 = vadd.f32 0.0, %v725
    %727 = vmatmul.bf16.gmra.mxu0 %v589
    %v728 = vpop.f32.mrf.mxu0
    %v729 = vadd.f32 0.0, %v728
    %v730 = vpop.f32.mrf.mxu0
    %v731 = vadd.f32 0.0, %v730
    %732 = vmatmul.bf16.gmra.mxu0 %v592
    %v733 = vpop.f32.mrf.mxu0
    %v734 = vadd.f32 0.0, %v733
    %v735 = vpop.f32.mrf.mxu0
    %v736 = vadd.f32 0.0, %v735
    %737 = vmatmul.bf16.gmra.mxu0 %v595
    %v738 = vpop.f32.mrf.mxu0
    %v739 = vadd.f32 0.0, %v738
    %v740 = vpop.f32.mrf.mxu0
    %v741 = vadd.f32 0.0, %v740
    %742 = vmatmul.bf16.gmra.mxu0 %v598
    %v743 = vpop.f32.mrf.mxu0
    %v744 = vadd.f32 0.0, %v743
    %v745 = vpop.f32.mrf.mxu0
    %v746 = vadd.f32 0.0, %v745
    %747 = vmatmul.bf16.gmra.mxu0 %v601
    %v748 = vpop.f32.mrf.mxu0
    %v749 = vadd.f32 0.0, %v748
    %v750 = vpop.f32.mrf.mxu0
    %v751 = vadd.f32 0.0, %v750
    %752 = vmatmul.bf16.gmra.mxu0 %v604
    %v753 = vpop.f32.mrf.mxu0
    %v754 = vadd.f32 0.0, %v753
    %v755 = vpop.f32.mrf.mxu0
    %v756 = vadd.f32 0.0, %v755
    %757 = vmatmul.bf16.gmra.mxu0 %v607
    %v758 = vpop.f32.mrf.mxu0
    %v759 = vadd.f32 0.0, %v758
    %v760 = vpop.f32.mrf.mxu0
    %v761 = vadd.f32 0.0, %v760
    %762 = vdwg.mxu0
    %v891 = vunpack.c.l.b16 %v450
    %v892 = vunpack.c.h.b16 %v450
    %v893 = vunpack.c.l.b16 %v451
    %v894 = vunpack.c.l.b16 %v452
    %v895 = vunpack.c.h.b16 %v452
    %v896 = vunpack.c.l.b16 %v453
    %v897 = vunpack.c.l.b16 %v454
    %v898 = vunpack.c.h.b16 %v454
    %v899 = vunpack.c.l.b16 %v455
    %v900 = vunpack.c.l.b16 %v456
    %v901 = vunpack.c.h.b16 %v456
    %v902 = vunpack.c.l.b16 %v457
    %v903 = vunpack.c.l.b16 %v458
    %v904 = vunpack.c.h.b16 %v458
    %v905 = vunpack.c.l.b16 %v459
    %v906 = vunpack.c.l.b16 %v460
    %v907 = vunpack.c.h.b16 %v460
    %v908 = vunpack.c.l.b16 %v461
    %v909 = vunpack.c.l.b16 %v462
    %v910 = vunpack.c.h.b16 %v462
    %v911 = vunpack.c.l.b16 %v463
    %v912 = vunpack.c.l.b16 %v464
    %v913 = vunpack.c.h.b16 %v464
    %v914 = vunpack.c.l.b16 %v465
    %v915 = vunpack.c.l.b16 %v466
    %v916 = vunpack.c.h.b16 %v466
    %v917 = vunpack.c.l.b16 %v467
    %v918 = vunpack.c.l.b16 %v468
    %v919 = vunpack.c.h.b16 %v468
    %v920 = vunpack.c.l.b16 %v469
    %v921 = vunpack.c.l.b16 %v470
    %v922 = vunpack.c.h.b16 %v470
    %v923 = vunpack.c.l.b16 %v471
    %v924 = vunpack.c.l.b16 %v472
    %v925 = vunpack.c.h.b16 %v472
    %v926 = vunpack.c.l.b16 %v473
    %v927 = vunpack.c.l.b16 %v474
    %v928 = vunpack.c.h.b16 %v474
    %v929 = vunpack.c.l.b16 %v475
    %v930 = vunpack.c.l.b16 %v476
    %v931 = vunpack.c.h.b16 %v476
    %v932 = vunpack.c.l.b16 %v477
    %v933 = vunpack.c.l.b16 %v478
    %v934 = vunpack.c.h.b16 %v478
    %v935 = vunpack.c.l.b16 %v479
    %v936 = vunpack.c.l.b16 %v480
    %v937 = vunpack.c.h.b16 %v480
    %v938 = vunpack.c.l.b16 %v481
    %v939 = vunpack.c.l.b16 %v482
    %v940 = vunpack.c.h.b16 %v482
    %v941 = vunpack.c.l.b16 %v483
    %v942 = vunpack.c.l.b16 %v484
    %v943 = vunpack.c.h.b16 %v484
    %v944 = vunpack.c.l.b16 %v485
    %v945 = vunpack.c.l.b16 %v486
    %v946 = vunpack.c.h.b16 %v486
    %v947 = vunpack.c.l.b16 %v487
    %v948 = vunpack.c.l.b16 %v488
    %v949 = vunpack.c.h.b16 %v488
    %v950 = vunpack.c.l.b16 %v489
    %v951 = vunpack.c.l.b16 %v490
    %v952 = vunpack.c.h.b16 %v490
    %v953 = vunpack.c.l.b16 %v491
    %v954 = vunpack.c.l.b16 %v492
    %v955 = vunpack.c.h.b16 %v492
    %v956 = vunpack.c.l.b16 %v493
    %v957 = vunpack.c.l.b16 %v494
    %v958 = vunpack.c.h.b16 %v494
    %v959 = vunpack.c.l.b16 %v495
    %v960 = vunpack.c.l.b16 %v496
    %v961 = vunpack.c.h.b16 %v496
    %v962 = vunpack.c.l.b16 %v497
    %v963 = vunpack.c.l.b16 %v498
    %v964 = vunpack.c.h.b16 %v498
    %v965 = vunpack.c.l.b16 %v499
    %v966 = vunpack.c.l.b16 %v500
    %v967 = vunpack.c.h.b16 %v500
    %v968 = vunpack.c.l.b16 %v501
    %v969 = vunpack.c.l.b16 %v502
    %v970 = vunpack.c.h.b16 %v502
    %v971 = vunpack.c.l.b16 %v503
    %v972 = vunpack.c.l.b16 %v504
    %v973 = vunpack.c.h.b16 %v504
    %v974 = vunpack.c.l.b16 %v505
    %v975 = vunpack.c.l.b16 %v506
    %v976 = vunpack.c.h.b16 %v506
    %v977 = vunpack.c.l.b16 %v507
    %v978 = vunpack.c.l.b16 %v508
    %v979 = vunpack.c.h.b16 %v508
    %v980 = vunpack.c.l.b16 %v509
    %v981 = vunpack.c.l.b16 %v510
    %v982 = vunpack.c.h.b16 %v510
    %v983 = vunpack.c.l.b16 %v511
    %v984 = vunpack.c.l.b16 %v512
    %v985 = vunpack.c.h.b16 %v512
    %v986 = vunpack.c.l.b16 %v513
    %v987 = vunpack.c.l.b16 %v514
    %v988 = vunpack.c.h.b16 %v514
    %v989 = vunpack.c.l.b16 %v515
    %v990 = vunpack.c.l.b16 %v516
    %v991 = vunpack.c.h.b16 %v516
    %v992 = vunpack.c.l.b16 %v517
    %v993 = vunpack.c.l.b16 %v518
    %v994 = vunpack.c.h.b16 %v518
    %v995 = vunpack.c.l.b16 %v519
    %v996 = vunpack.c.l.b16 %v520
    %v997 = vunpack.c.h.b16 %v520
    %v998 = vunpack.c.l.b16 %v521
    %v999 = vunpack.c.l.b16 %v522
    %v1000 = vunpack.c.h.b16 %v522
    %v1001 = vunpack.c.l.b16 %v523
    %v1002 = vunpack.c.l.b16 %v524
    %v1003 = vunpack.c.h.b16 %v524
    %v1004 = vunpack.c.l.b16 %v525
    %v1005 = vunpack.c.l.b16 %v526
    %v1006 = vunpack.c.h.b16 %v526
    %v1007 = vunpack.c.l.b16 %v527
    %v1008 = vunpack.c.l.b16 %v528
    %v1009 = vunpack.c.h.b16 %v528
    %v1010 = vunpack.c.l.b16 %v529
    %v1011 = vunpack.c.l.b16 %v530
    %v1012 = vunpack.c.h.b16 %v530
    %v1013 = vunpack.c.l.b16 %v531
    %v1014 = vunpack.c.l.b16 %v532
    %v1015 = vunpack.c.h.b16 %v532
    %v1016 = vunpack.c.l.b16 %v533
    %v1017 = vunpack.c.l.b16 %v534
    %v1018 = vunpack.c.h.b16 %v534
    %v1019 = vunpack.c.l.b16 %v535
    %v1020 = vunpack.c.l.b16 %v536
    %v1021 = vunpack.c.h.b16 %v536
    %v1022 = vunpack.c.l.b16 %v537
    %v1023 = vunpack.c.l.b16 %v538
    %v1024 = vunpack.c.h.b16 %v538
    %v1025 = vunpack.c.l.b16 %v539
    %v1026 = vunpack.c.l.b16 %v540
    %v1027 = vunpack.c.h.b16 %v540
    %v1028 = vunpack.c.l.b16 %v541
    %v1029 = vunpack.c.l.b16 %v542
    %v1030 = vunpack.c.h.b16 %v542
    %v1031 = vunpack.c.l.b16 %v543
    %v1032 = vunpack.c.l.b16 %v544
    %v1033 = vunpack.c.h.b16 %v544
    %v1034 = vunpack.c.l.b16 %v545
    %v1035 = vunpack.c.l.b16 %v546
    %v1036 = vunpack.c.h.b16 %v546
    %v1037 = vunpack.c.l.b16 %v547
    %v1038 = vunpack.c.l.b16 %v548
    %v1039 = vunpack.c.h.b16 %v548
    %v1040 = vunpack.c.l.b16 %v549
    %v1041 = vunpack.c.l.b16 %v550
    %v1042 = vunpack.c.h.b16 %v550
    %v1043 = vunpack.c.l.b16 %v551
    %v1044 = vunpack.c.l.b16 %v552
    %v1045 = vunpack.c.h.b16 %v552
    %v1046 = vunpack.c.l.b16 %v553
    %v1047 = vunpack.c.l.b16 %v554
    %v1048 = vunpack.c.h.b16 %v554
    %v1049 = vunpack.c.l.b16 %v555
    %v1050 = vunpack.c.l.b16 %v556
    %v1051 = vunpack.c.h.b16 %v556
    %v1052 = vunpack.c.l.b16 %v557
    %v1053 = vunpack.c.l.b16 %v558
    %v1054 = vunpack.c.h.b16 %v558
    %v1055 = vunpack.c.l.b16 %v559
    %v1056 = vunpack.c.l.b16 %v560
    %v1057 = vunpack.c.h.b16 %v560
    %v1058 = vunpack.c.l.b16 %v561
    %v1059 = vunpack.c.l.b16 %v562
    %v1060 = vunpack.c.h.b16 %v562
    %v1061 = vunpack.c.l.b16 %v563
    %v1062 = vunpack.c.l.b16 %v564
    %v1063 = vunpack.c.h.b16 %v564
    %v1064 = vunpack.c.l.b16 %v565
    %v1065 = vunpack.c.l.b16 %v566
    %v1066 = vunpack.c.h.b16 %v566
    %v1067 = vunpack.c.l.b16 %v567
    %v1068 = vunpack.c.l.b16 %v568
    %v1069 = vunpack.c.h.b16 %v568
    %v1070 = vunpack.c.l.b16 %v569
    %v1071 = vunpack.c.l.b16 %v570
    %v1072 = vunpack.c.h.b16 %v570
    %v1073 = vunpack.c.l.b16 %v571
    %v1074 = vunpack.c.l.b16 %v572
    %v1075 = vunpack.c.h.b16 %v572
    %v1076 = vunpack.c.l.b16 %v573
    %v1077 = vunpack.c.l.b16 %v574
    %v1078 = vunpack.c.h.b16 %v574
    %v1079 = vunpack.c.l.b16 %v575
    %v1080 = vunpack.c.l.b16 %v576
    %v1081 = vunpack.c.h.b16 %v576
    %v1082 = vunpack.c.l.b16 %v577
    %v1083 = vpack.c.b16 %v894, %v891
    %v1084 = vpack.c.b16 %v895, %v892
    %v1085 = vpack.c.b16 %v896, %v893
    %v1086 = vpack.c.b16 %v900, %v897
    %v1087 = vpack.c.b16 %v901, %v898
    %v1088 = vpack.c.b16 %v902, %v899
    %v1089 = vpack.c.b16 %v906, %v903
    %v1090 = vpack.c.b16 %v907, %v904
    %v1091 = vpack.c.b16 %v908, %v905
    %v1092 = vpack.c.b16 %v912, %v909
    %v1093 = vpack.c.b16 %v913, %v910
    %v1094 = vpack.c.b16 %v914, %v911
    %v1095 = vpack.c.b16 %v918, %v915
    %v1096 = vpack.c.b16 %v919, %v916
    %v1097 = vpack.c.b16 %v920, %v917
    %v1098 = vpack.c.b16 %v924, %v921
    %v1099 = vpack.c.b16 %v925, %v922
    %v1100 = vpack.c.b16 %v926, %v923
    %v1101 = vpack.c.b16 %v930, %v927
    %v1102 = vpack.c.b16 %v931, %v928
    %v1103 = vpack.c.b16 %v932, %v929
    %v1104 = vpack.c.b16 %v936, %v933
    %v1105 = vpack.c.b16 %v937, %v934
    %v1106 = vpack.c.b16 %v938, %v935
    %v1107 = vpack.c.b16 %v942, %v939
    %v1108 = vpack.c.b16 %v943, %v940
    %v1109 = vpack.c.b16 %v944, %v941
    %v1110 = vpack.c.b16 %v948, %v945
    %v1111 = vpack.c.b16 %v949, %v946
    %v1112 = vpack.c.b16 %v950, %v947
    %v1113 = vpack.c.b16 %v954, %v951
    %v1114 = vpack.c.b16 %v955, %v952
    %v1115 = vpack.c.b16 %v956, %v953
    %v1116 = vpack.c.b16 %v960, %v957
    %v1117 = vpack.c.b16 %v961, %v958
    %v1118 = vpack.c.b16 %v962, %v959
    %v1119 = vpack.c.b16 %v966, %v963
    %v1120 = vpack.c.b16 %v967, %v964
    %v1121 = vpack.c.b16 %v968, %v965
    %v1122 = vpack.c.b16 %v972, %v969
    %v1123 = vpack.c.b16 %v973, %v970
    %v1124 = vpack.c.b16 %v974, %v971
    %v1125 = vpack.c.b16 %v978, %v975
    %v1126 = vpack.c.b16 %v979, %v976
    %v1127 = vpack.c.b16 %v980, %v977
    %v1128 = vpack.c.b16 %v984, %v981
    %v1129 = vpack.c.b16 %v985, %v982
    %v1130 = vpack.c.b16 %v986, %v983
    %v1131 = vpack.c.b16 %v990, %v987
    %v1132 = vpack.c.b16 %v991, %v988
    %v1133 = vpack.c.b16 %v992, %v989
    %v1134 = vpack.c.b16 %v996, %v993
    %v1135 = vpack.c.b16 %v997, %v994
    %v1136 = vpack.c.b16 %v998, %v995
    %v1137 = vpack.c.b16 %v1002, %v999
    %v1138 = vpack.c.b16 %v1003, %v1000
    %v1139 = vpack.c.b16 %v1004, %v1001
    %v1140 = vpack.c.b16 %v1008, %v1005
    %v1141 = vpack.c.b16 %v1009, %v1006
    %v1142 = vpack.c.b16 %v1010, %v1007
    %v1143 = vpack.c.b16 %v1014, %v1011
    %v1144 = vpack.c.b16 %v1015, %v1012
    %v1145 = vpack.c.b16 %v1016, %v1013
    %v1146 = vpack.c.b16 %v1020, %v1017
    %v1147 = vpack.c.b16 %v1021, %v1018
    %v1148 = vpack.c.b16 %v1022, %v1019
    %v1149 = vpack.c.b16 %v1026, %v1023
    %v1150 = vpack.c.b16 %v1027, %v1024
    %v1151 = vpack.c.b16 %v1028, %v1025
    %v1152 = vpack.c.b16 %v1032, %v1029
    %v1153 = vpack.c.b16 %v1033, %v1030
    %v1154 = vpack.c.b16 %v1034, %v1031
    %v1155 = vpack.c.b16 %v1038, %v1035
    %v1156 = vpack.c.b16 %v1039, %v1036
    %v1157 = vpack.c.b16 %v1040, %v1037
    %v1158 = vpack.c.b16 %v1044, %v1041
    %v1159 = vpack.c.b16 %v1045, %v1042
    %v1160 = vpack.c.b16 %v1046, %v1043
    %v1161 = vpack.c.b16 %v1050, %v1047
    %v1162 = vpack.c.b16 %v1051, %v1048
    %v1163 = vpack.c.b16 %v1052, %v1049
    %v1164 = vpack.c.b16 %v1056, %v1053
    %v1165 = vpack.c.b16 %v1057, %v1054
    %v1166 = vpack.c.b16 %v1058, %v1055
    %v1167 = vpack.c.b16 %v1062, %v1059
    %v1168 = vpack.c.b16 %v1063, %v1060
    %v1169 = vpack.c.b16 %v1064, %v1061
    %v1170 = vpack.c.b16 %v1068, %v1065
    %v1171 = vpack.c.b16 %v1069, %v1066
    %v1172 = vpack.c.b16 %v1070, %v1067
    %v1173 = vpack.c.b16 %v1074, %v1071
    %v1174 = vpack.c.b16 %v1075, %v1072
    %v1175 = vpack.c.b16 %v1076, %v1073
    %v1176 = vpack.c.b16 %v1080, %v1077
    %v1177 = vpack.c.b16 %v1081, %v1078
    %v1178 = vpack.c.b16 %v1082, %v1079
    %1275 = vmatpush.bf16.msra.mxu0 %v1104
    %1276 = vmatpush.bf16.msra.mxu0 %v1101
    %1277 = vmatpush.bf16.msra.mxu0 %v1098
    %1278 = vmatpush.bf16.msra.mxu0 %v1095
    %1279 = vmatpush.bf16.msra.mxu0 %v1092
    %1280 = vmatpush.bf16.msra.mxu0 %v1089
    %1281 = vmatpush.bf16.msra.mxu0 %v1086
    %1282 = vmatpush.bf16.msra.mxu0 %v1083
    %1283 = vmatmul.bf16.gmra.mxu0 %v418
    %v1284 = vpop.f32.mrf.mxu0
    %v1285 = vadd.f32 %v626, %v1284
    %v1286 = vpop.f32.mrf.mxu0
    %v1287 = vadd.f32 %v628, %v1286
    %1288 = vmatmul.bf16.gmra.mxu0 %v422
    %v1289 = vpop.f32.mrf.mxu0
    %v1290 = vadd.f32 %v631, %v1289
    %v1291 = vpop.f32.mrf.mxu0
    %v1292 = vadd.f32 %v633, %v1291
    %1293 = vmatmul.bf16.gmra.mxu0 %v426
    %v1294 = vpop.f32.mrf.mxu0
    %v1295 = vadd.f32 %v636, %v1294
    %v1296 = vpop.f32.mrf.mxu0
    %v1297 = vadd.f32 %v638, %v1296
    %1298 = vmatmul.bf16.gmra.mxu0 %v430
    %v1299 = vpop.f32.mrf.mxu0
    %v1300 = vadd.f32 %v641, %v1299
    %v1301 = vpop.f32.mrf.mxu0
    %v1302 = vadd.f32 %v643, %v1301
    %1303 = vmatmul.bf16.gmra.mxu0 %v434
    %v1304 = vpop.f32.mrf.mxu0
    %v1305 = vadd.f32 %v646, %v1304
    %v1306 = vpop.f32.mrf.mxu0
    %v1307 = vadd.f32 %v648, %v1306
    %1308 = vmatmul.bf16.gmra.mxu0 %v438
    %v1309 = vpop.f32.mrf.mxu0
    %v1310 = vadd.f32 %v651, %v1309
    %v1311 = vpop.f32.mrf.mxu0
    %v1312 = vadd.f32 %v653, %v1311
    %1313 = vmatmul.bf16.gmra.mxu0 %v442
    %v1314 = vpop.f32.mrf.mxu0
    %v1315 = vadd.f32 %v656, %v1314
    %v1316 = vpop.f32.mrf.mxu0
    %v1317 = vadd.f32 %v658, %v1316
    %1318 = vmatmul.bf16.gmra.mxu0 %v446
    %v1319 = vpop.f32.mrf.mxu0
    %v1320 = vadd.f32 %v661, %v1319
    %v1321 = vpop.f32.mrf.mxu0
    %v1322 = vadd.f32 %v663, %v1321
    %1323 = vdwg.mxu0
    %1324 = vmatpush.bf16.msra.mxu0 %v1128
    %1325 = vmatpush.bf16.msra.mxu0 %v1125
    %1326 = vmatpush.bf16.msra.mxu0 %v1122
    %1327 = vmatpush.bf16.msra.mxu0 %v1119
    %1328 = vmatpush.bf16.msra.mxu0 %v1116
    %1329 = vmatpush.bf16.msra.mxu0 %v1113
    %1330 = vmatpush.bf16.msra.mxu0 %v1110
    %1331 = vmatpush.bf16.msra.mxu0 %v1107
    %1332 = vmatmul.bf16.gmra.mxu0 %v419
    %v1333 = vpop.f32.mrf.mxu0
    %v1334 = vadd.f32 %v1285, %v1333
    %v1335 = vpop.f32.mrf.mxu0
    %v1336 = vadd.f32 %v1287, %v1335
    %1337 = vmatmul.bf16.gmra.mxu0 %v423
    %v1338 = vpop.f32.mrf.mxu0
    %v1339 = vadd.f32 %v1290, %v1338
    %v1340 = vpop.f32.mrf.mxu0
    %v1341 = vadd.f32 %v1292, %v1340
    %1342 = vmatmul.bf16.gmra.mxu0 %v427
    %v1343 = vpop.f32.mrf.mxu0
    %v1344 = vadd.f32 %v1295, %v1343
    %v1345 = vpop.f32.mrf.mxu0
    %v1346 = vadd.f32 %v1297, %v1345
    %1347 = vmatmul.bf16.gmra.mxu0 %v431
    %v1348 = vpop.f32.mrf.mxu0
    %v1349 = vadd.f32 %v1300, %v1348
    %v1350 = vpop.f32.mrf.mxu0
    %v1351 = vadd.f32 %v1302, %v1350
    %1352 = vmatmul.bf16.gmra.mxu0 %v435
    %v1353 = vpop.f32.mrf.mxu0
    %v1354 = vadd.f32 %v1305, %v1353
    %v1355 = vpop.f32.mrf.mxu0
    %v1356 = vadd.f32 %v1307, %v1355
    %1357 = vmatmul.bf16.gmra.mxu0 %v439
    %v1358 = vpop.f32.mrf.mxu0
    %v1359 = vadd.f32 %v1310, %v1358
    %v1360 = vpop.f32.mrf.mxu0
    %v1361 = vadd.f32 %v1312, %v1360
    %1362 = vmatmul.bf16.gmra.mxu0 %v443
    %v1363 = vpop.f32.mrf.mxu0
    %v1364 = vadd.f32 %v1315, %v1363
    %v1365 = vpop.f32.mrf.mxu0
    %v1366 = vadd.f32 %v1317, %v1365
    %1367 = vmatmul.bf16.gmra.mxu0 %v447
    %v1368 = vpop.f32.mrf.mxu0
    %v1369 = vadd.f32 %v1320, %v1368
    %v1370 = vpop.f32.mrf.mxu0
    %v1371 = vadd.f32 %v1322, %v1370
    %1372 = vdwg.mxu0
    %1373 = vmatpush.bf16.msra.mxu0 %v1152
    %1374 = vmatpush.bf16.msra.mxu0 %v1149
    %1375 = vmatpush.bf16.msra.mxu0 %v1146
    %1376 = vmatpush.bf16.msra.mxu0 %v1143
    %1377 = vmatpush.bf16.msra.mxu0 %v1140
    %1378 = vmatpush.bf16.msra.mxu0 %v1137
    %1379 = vmatpush.bf16.msra.mxu0 %v1134
    %1380 = vmatpush.bf16.msra.mxu0 %v1131
    %1381 = vmatmul.bf16.gmra.mxu0 %v420
    %v1382 = vpop.f32.mrf.mxu0
    %v1383 = vadd.f32 %v1334, %v1382
    %v1384 = vpop.f32.mrf.mxu0
    %v1385 = vadd.f32 %v1336, %v1384
    %1386 = vmatmul.bf16.gmra.mxu0 %v424
    %v1387 = vpop.f32.mrf.mxu0
    %v1388 = vadd.f32 %v1339, %v1387
    %v1389 = vpop.f32.mrf.mxu0
    %v1390 = vadd.f32 %v1341, %v1389
    %1391 = vmatmul.bf16.gmra.mxu0 %v428
    %v1392 = vpop.f32.mrf.mxu0
    %v1393 = vadd.f32 %v1344, %v1392
    %v1394 = vpop.f32.mrf.mxu0
    %v1395 = vadd.f32 %v1346, %v1394
    %1396 = vmatmul.bf16.gmra.mxu0 %v432
    %v1397 = vpop.f32.mrf.mxu0
    %v1398 = vadd.f32 %v1349, %v1397
    %v1399 = vpop.f32.mrf.mxu0
    %v1400 = vadd.f32 %v1351, %v1399
    %1401 = vmatmul.bf16.gmra.mxu0 %v436
    %v1402 = vpop.f32.mrf.mxu0
    %v1403 = vadd.f32 %v1354, %v1402
    %v1404 = vpop.f32.mrf.mxu0
    %v1405 = vadd.f32 %v1356, %v1404
    %1406 = vmatmul.bf16.gmra.mxu0 %v440
    %v1407 = vpop.f32.mrf.mxu0
    %v1408 = vadd.f32 %v1359, %v1407
    %v1409 = vpop.f32.mrf.mxu0
    %v1410 = vadd.f32 %v1361, %v1409
    %1411 = vmatmul.bf16.gmra.mxu0 %v444
    %v1412 = vpop.f32.mrf.mxu0
    %v1413 = vadd.f32 %v1364, %v1412
    %v1414 = vpop.f32.mrf.mxu0
    %v1415 = vadd.f32 %v1366, %v1414
    %1416 = vmatmul.bf16.gmra.mxu0 %v448
    %v1417 = vpop.f32.mrf.mxu0
    %v1418 = vadd.f32 %v1369, %v1417
    %v1419 = vpop.f32.mrf.mxu0
    %v1420 = vadd.f32 %v1371, %v1419
    %1421 = vdwg.mxu0
    %1422 = vmatpush.bf16.msra.mxu0 %v1176
    %1423 = vmatpush.bf16.msra.mxu0 %v1173
    %1424 = vmatpush.bf16.msra.mxu0 %v1170
    %1425 = vmatpush.bf16.msra.mxu0 %v1167
    %1426 = vmatpush.bf16.msra.mxu0 %v1164
    %1427 = vmatpush.bf16.msra.mxu0 %v1161
    %1428 = vmatpush.bf16.msra.mxu0 %v1158
    %1429 = vmatpush.bf16.msra.mxu0 %v1155
    %1430 = vmatmul.bf16.gmra.mxu0 %v421
    %v1431 = vpop.f32.mrf.mxu0
    %v1432 = vadd.f32 %v1383, %v1431
    %v1433 = vpop.f32.mrf.mxu0
    %v1434 = vadd.f32 %v1385, %v1433
    %1435 = vmatmul.bf16.gmra.mxu0 %v425
    %v1436 = vpop.f32.mrf.mxu0
    %v1437 = vadd.f32 %v1388, %v1436
    %v1438 = vpop.f32.mrf.mxu0
    %v1439 = vadd.f32 %v1390, %v1438
    %1440 = vmatmul.bf16.gmra.mxu0 %v429
    %v1441 = vpop.f32.mrf.mxu0
    %v1442 = vadd.f32 %v1393, %v1441
    %v1443 = vpop.f32.mrf.mxu0
    %v1444 = vadd.f32 %v1395, %v1443
    %1445 = vmatmul.bf16.gmra.mxu0 %v433
    %v1446 = vpop.f32.mrf.mxu0
    %v1447 = vadd.f32 %v1398, %v1446
    %v1448 = vpop.f32.mrf.mxu0
    %v1449 = vadd.f32 %v1400, %v1448
    %1450 = vmatmul.bf16.gmra.mxu0 %v437
    %v1451 = vpop.f32.mrf.mxu0
    %v1452 = vadd.f32 %v1403, %v1451
    %v1453 = vpop.f32.mrf.mxu0
    %v1454 = vadd.f32 %v1405, %v1453
    %1455 = vmatmul.bf16.gmra.mxu0 %v441
    %v1456 = vpop.f32.mrf.mxu0
    %v1457 = vadd.f32 %v1408, %v1456
    %v1458 = vpop.f32.mrf.mxu0
    %v1459 = vadd.f32 %v1410, %v1458
    %1460 = vmatmul.bf16.gmra.mxu0 %v445
    %v1461 = vpop.f32.mrf.mxu0
    %v1462 = vadd.f32 %v1413, %v1461
    %v1463 = vpop.f32.mrf.mxu0
    %v1464 = vadd.f32 %v1415, %v1463
    %1465 = vmatmul.bf16.gmra.mxu0 %v449
    %v1466 = vpop.f32.mrf.mxu0
    %v1467 = vadd.f32 %v1418, %v1466
    %v1468 = vpop.f32.mrf.mxu0
    %v1469 = vadd.f32 %v1420, %v1468
    %1470 = vdwg.mxu0
    %1471 = vmatpush.bf16.msra.mxu0 %v1105
    %1472 = vmatpush.bf16.msra.mxu0 %v1102
    %1473 = vmatpush.bf16.msra.mxu0 %v1099
    %1474 = vmatpush.bf16.msra.mxu0 %v1096
    %1475 = vmatpush.bf16.msra.mxu0 %v1093
    %1476 = vmatpush.bf16.msra.mxu0 %v1090
    %1477 = vmatpush.bf16.msra.mxu0 %v1087
    %1478 = vmatpush.bf16.msra.mxu0 %v1084
    %1479 = vmatmul.bf16.gmra.mxu0 %v418
    %v1480 = vpop.f32.mrf.mxu0
    %v1481 = vadd.f32 %v675, %v1480
    %v1482 = vpop.f32.mrf.mxu0
    %v1483 = vadd.f32 %v677, %v1482
    %1484 = vmatmul.bf16.gmra.mxu0 %v422
    %v1485 = vpop.f32.mrf.mxu0
    %v1486 = vadd.f32 %v680, %v1485
    %v1487 = vpop.f32.mrf.mxu0
    %v1488 = vadd.f32 %v682, %v1487
    %1489 = vmatmul.bf16.gmra.mxu0 %v426
    %v1490 = vpop.f32.mrf.mxu0
    %v1491 = vadd.f32 %v685, %v1490
    %v1492 = vpop.f32.mrf.mxu0
    %v1493 = vadd.f32 %v687, %v1492
    %1494 = vmatmul.bf16.gmra.mxu0 %v430
    %v1495 = vpop.f32.mrf.mxu0
    %v1496 = vadd.f32 %v690, %v1495
    %v1497 = vpop.f32.mrf.mxu0
    %v1498 = vadd.f32 %v692, %v1497
    %1499 = vmatmul.bf16.gmra.mxu0 %v434
    %v1500 = vpop.f32.mrf.mxu0
    %v1501 = vadd.f32 %v695, %v1500
    %v1502 = vpop.f32.mrf.mxu0
    %v1503 = vadd.f32 %v697, %v1502
    %1504 = vmatmul.bf16.gmra.mxu0 %v438
    %v1505 = vpop.f32.mrf.mxu0
    %v1506 = vadd.f32 %v700, %v1505
    %v1507 = vpop.f32.mrf.mxu0
    %v1508 = vadd.f32 %v702, %v1507
    %1509 = vmatmul.bf16.gmra.mxu0 %v442
    %v1510 = vpop.f32.mrf.mxu0
    %v1511 = vadd.f32 %v705, %v1510
    %v1512 = vpop.f32.mrf.mxu0
    %v1513 = vadd.f32 %v707, %v1512
    %1514 = vmatmul.bf16.gmra.mxu0 %v446
    %v1515 = vpop.f32.mrf.mxu0
    %v1516 = vadd.f32 %v710, %v1515
    %v1517 = vpop.f32.mrf.mxu0
    %v1518 = vadd.f32 %v712, %v1517
    %1519 = vdwg.mxu0
    %1520 = vmatpush.bf16.msra.mxu0 %v1129
    %1521 = vmatpush.bf16.msra.mxu0 %v1126
    %1522 = vmatpush.bf16.msra.mxu0 %v1123
    %1523 = vmatpush.bf16.msra.mxu0 %v1120
    %1524 = vmatpush.bf16.msra.mxu0 %v1117
    %1525 = vmatpush.bf16.msra.mxu0 %v1114
    %1526 = vmatpush.bf16.msra.mxu0 %v1111
    %1527 = vmatpush.bf16.msra.mxu0 %v1108
    %1528 = vmatmul.bf16.gmra.mxu0 %v419
    %v1529 = vpop.f32.mrf.mxu0
    %v1530 = vadd.f32 %v1481, %v1529
    %v1531 = vpop.f32.mrf.mxu0
    %v1532 = vadd.f32 %v1483, %v1531
    %1533 = vmatmul.bf16.gmra.mxu0 %v423
    %v1534 = vpop.f32.mrf.mxu0
    %v1535 = vadd.f32 %v1486, %v1534
    %v1536 = vpop.f32.mrf.mxu0
    %v1537 = vadd.f32 %v1488, %v1536
    %1538 = vmatmul.bf16.gmra.mxu0 %v427
    %v1539 = vpop.f32.mrf.mxu0
    %v1540 = vadd.f32 %v1491, %v1539
    %v1541 = vpop.f32.mrf.mxu0
    %v1542 = vadd.f32 %v1493, %v1541
    %1543 = vmatmul.bf16.gmra.mxu0 %v431
    %v1544 = vpop.f32.mrf.mxu0
    %v1545 = vadd.f32 %v1496, %v1544
    %v1546 = vpop.f32.mrf.mxu0
    %v1547 = vadd.f32 %v1498, %v1546
    %1548 = vmatmul.bf16.gmra.mxu0 %v435
    %v1549 = vpop.f32.mrf.mxu0
    %v1550 = vadd.f32 %v1501, %v1549
    %v1551 = vpop.f32.mrf.mxu0
    %v1552 = vadd.f32 %v1503, %v1551
    %1553 = vmatmul.bf16.gmra.mxu0 %v439
    %v1554 = vpop.f32.mrf.mxu0
    %v1555 = vadd.f32 %v1506, %v1554
    %v1556 = vpop.f32.mrf.mxu0
    %v1557 = vadd.f32 %v1508, %v1556
    %1558 = vmatmul.bf16.gmra.mxu0 %v443
    %v1559 = vpop.f32.mrf.mxu0
    %v1560 = vadd.f32 %v1511, %v1559
    %v1561 = vpop.f32.mrf.mxu0
    %v1562 = vadd.f32 %v1513, %v1561
    %1563 = vmatmul.bf16.gmra.mxu0 %v447
    %v1564 = vpop.f32.mrf.mxu0
    %v1565 = vadd.f32 %v1516, %v1564
    %v1566 = vpop.f32.mrf.mxu0
    %v1567 = vadd.f32 %v1518, %v1566
    %1568 = vdwg.mxu0
    %1569 = vmatpush.bf16.msra.mxu0 %v1153
    %1570 = vmatpush.bf16.msra.mxu0 %v1150
    %1571 = vmatpush.bf16.msra.mxu0 %v1147
    %1572 = vmatpush.bf16.msra.mxu0 %v1144
    %1573 = vmatpush.bf16.msra.mxu0 %v1141
    %1574 = vmatpush.bf16.msra.mxu0 %v1138
    %1575 = vmatpush.bf16.msra.mxu0 %v1135
    %1576 = vmatpush.bf16.msra.mxu0 %v1132
    %1577 = vmatmul.bf16.gmra.mxu0 %v420
    %v1578 = vpop.f32.mrf.mxu0
    %v1579 = vadd.f32 %v1530, %v1578
    %v1580 = vpop.f32.mrf.mxu0
    %v1581 = vadd.f32 %v1532, %v1580
    %1582 = vmatmul.bf16.gmra.mxu0 %v424
    %v1583 = vpop.f32.mrf.mxu0
    %v1584 = vadd.f32 %v1535, %v1583
    %v1585 = vpop.f32.mrf.mxu0
    %v1586 = vadd.f32 %v1537, %v1585
    %1587 = vmatmul.bf16.gmra.mxu0 %v428
    %v1588 = vpop.f32.mrf.mxu0
    %v1589 = vadd.f32 %v1540, %v1588
    %v1590 = vpop.f32.mrf.mxu0
    %v1591 = vadd.f32 %v1542, %v1590
    %1592 = vmatmul.bf16.gmra.mxu0 %v432
    %v1593 = vpop.f32.mrf.mxu0
    %v1594 = vadd.f32 %v1545, %v1593
    %v1595 = vpop.f32.mrf.mxu0
    %v1596 = vadd.f32 %v1547, %v1595
    %1597 = vmatmul.bf16.gmra.mxu0 %v436
    %v1598 = vpop.f32.mrf.mxu0
    %v1599 = vadd.f32 %v1550, %v1598
    %v1600 = vpop.f32.mrf.mxu0
    %v1601 = vadd.f32 %v1552, %v1600
    %1602 = vmatmul.bf16.gmra.mxu0 %v440
    %v1603 = vpop.f32.mrf.mxu0
    %v1604 = vadd.f32 %v1555, %v1603
    %v1605 = vpop.f32.mrf.mxu0
    %v1606 = vadd.f32 %v1557, %v1605
    %1607 = vmatmul.bf16.gmra.mxu0 %v444
    %v1608 = vpop.f32.mrf.mxu0
    %v1609 = vadd.f32 %v1560, %v1608
    %v1610 = vpop.f32.mrf.mxu0
    %v1611 = vadd.f32 %v1562, %v1610
    %1612 = vmatmul.bf16.gmra.mxu0 %v448
    %v1613 = vpop.f32.mrf.mxu0
    %v1614 = vadd.f32 %v1565, %v1613
    %v1615 = vpop.f32.mrf.mxu0
    %v1616 = vadd.f32 %v1567, %v1615
    %1617 = vdwg.mxu0
    %1618 = vmatpush.bf16.msra.mxu0 %v1177
    %1619 = vmatpush.bf16.msra.mxu0 %v1174
    %1620 = vmatpush.bf16.msra.mxu0 %v1171
    %1621 = vmatpush.bf16.msra.mxu0 %v1168
    %1622 = vmatpush.bf16.msra.mxu0 %v1165
    %1623 = vmatpush.bf16.msra.mxu0 %v1162
    %1624 = vmatpush.bf16.msra.mxu0 %v1159
    %1625 = vmatpush.bf16.msra.mxu0 %v1156
    %1626 = vmatmul.bf16.gmra.mxu0 %v421
    %v1627 = vpop.f32.mrf.mxu0
    %v1628 = vadd.f32 %v1579, %v1627
    %v1629 = vpop.f32.mrf.mxu0
    %v1630 = vadd.f32 %v1581, %v1629
    %1631 = vmatmul.bf16.gmra.mxu0 %v425
    %v1632 = vpop.f32.mrf.mxu0
    %v1633 = vadd.f32 %v1584, %v1632
    %v1634 = vpop.f32.mrf.mxu0
    %v1635 = vadd.f32 %v1586, %v1634
    %1636 = vmatmul.bf16.gmra.mxu0 %v429
    %v1637 = vpop.f32.mrf.mxu0
    %v1638 = vadd.f32 %v1589, %v1637
    %v1639 = vpop.f32.mrf.mxu0
    %v1640 = vadd.f32 %v1591, %v1639
    %1641 = vmatmul.bf16.gmra.mxu0 %v433
    %v1642 = vpop.f32.mrf.mxu0
    %v1643 = vadd.f32 %v1594, %v1642
    %v1644 = vpop.f32.mrf.mxu0
    %v1645 = vadd.f32 %v1596, %v1644
    %1646 = vmatmul.bf16.gmra.mxu0 %v437
    %v1647 = vpop.f32.mrf.mxu0
    %v1648 = vadd.f32 %v1599, %v1647
    %v1649 = vpop.f32.mrf.mxu0
    %v1650 = vadd.f32 %v1601, %v1649
    %1651 = vmatmul.bf16.gmra.mxu0 %v441
    %v1652 = vpop.f32.mrf.mxu0
    %v1653 = vadd.f32 %v1604, %v1652
    %v1654 = vpop.f32.mrf.mxu0
    %v1655 = vadd.f32 %v1606, %v1654
    %1656 = vmatmul.bf16.gmra.mxu0 %v445
    %v1657 = vpop.f32.mrf.mxu0
    %v1658 = vadd.f32 %v1609, %v1657
    %v1659 = vpop.f32.mrf.mxu0
    %v1660 = vadd.f32 %v1611, %v1659
    %1661 = vmatmul.bf16.gmra.mxu0 %v449
    %v1662 = vpop.f32.mrf.mxu0
    %v1663 = vadd.f32 %v1614, %v1662
    %v1664 = vpop.f32.mrf.mxu0
    %v1665 = vadd.f32 %v1616, %v1664
    %1666 = vdwg.mxu0
    %1667 = vmatpush.bf16.msra.mxu0 %v1106
    %1668 = vmatpush.bf16.msra.mxu0 %v1103
    %1669 = vmatpush.bf16.msra.mxu0 %v1100
    %1670 = vmatpush.bf16.msra.mxu0 %v1097
    %1671 = vmatpush.bf16.msra.mxu0 %v1094
    %1672 = vmatpush.bf16.msra.mxu0 %v1091
    %1673 = vmatpush.bf16.msra.mxu0 %v1088
    %1674 = vmatpush.bf16.msra.mxu0 %v1085
    %1675 = vmatmul.bf16.gmra.mxu0 %v418
    %v1676 = vpop.f32.mrf.mxu0
    %v1677 = vadd.f32 %v724, %v1676
    %v1678 = vpop.f32.mrf.mxu0
    %v1679 = vadd.f32 %v726, %v1678
    %1680 = vmatmul.bf16.gmra.mxu0 %v422
    %v1681 = vpop.f32.mrf.mxu0
    %v1682 = vadd.f32 %v729, %v1681
    %v1683 = vpop.f32.mrf.mxu0
    %v1684 = vadd.f32 %v731, %v1683
    %1685 = vmatmul.bf16.gmra.mxu0 %v426
    %v1686 = vpop.f32.mrf.mxu0
    %v1687 = vadd.f32 %v734, %v1686
    %v1688 = vpop.f32.mrf.mxu0
    %v1689 = vadd.f32 %v736, %v1688
    %1690 = vmatmul.bf16.gmra.mxu0 %v430
    %v1691 = vpop.f32.mrf.mxu0
    %v1692 = vadd.f32 %v739, %v1691
    %v1693 = vpop.f32.mrf.mxu0
    %v1694 = vadd.f32 %v741, %v1693
    %1695 = vmatmul.bf16.gmra.mxu0 %v434
    %v1696 = vpop.f32.mrf.mxu0
    %v1697 = vadd.f32 %v744, %v1696
    %v1698 = vpop.f32.mrf.mxu0
    %v1699 = vadd.f32 %v746, %v1698
    %1700 = vmatmul.bf16.gmra.mxu0 %v438
    %v1701 = vpop.f32.mrf.mxu0
    %v1702 = vadd.f32 %v749, %v1701
    %v1703 = vpop.f32.mrf.mxu0
    %v1704 = vadd.f32 %v751, %v1703
    %1705 = vmatmul.bf16.gmra.mxu0 %v442
    %v1706 = vpop.f32.mrf.mxu0
    %v1707 = vadd.f32 %v754, %v1706
    %v1708 = vpop.f32.mrf.mxu0
    %v1709 = vadd.f32 %v756, %v1708
    %1710 = vmatmul.bf16.gmra.mxu0 %v446
    %v1711 = vpop.f32.mrf.mxu0
    %v1712 = vadd.f32 %v759, %v1711
    %v1713 = vpop.f32.mrf.mxu0
    %v1714 = vadd.f32 %v761, %v1713
    %1715 = vdwg.mxu0
    %1716 = vmatpush.bf16.msra.mxu0 %v1130
    %1717 = vmatpush.bf16.msra.mxu0 %v1127
    %1718 = vmatpush.bf16.msra.mxu0 %v1124
    %1719 = vmatpush.bf16.msra.mxu0 %v1121
    %1720 = vmatpush.bf16.msra.mxu0 %v1118
    %1721 = vmatpush.bf16.msra.mxu0 %v1115
    %1722 = vmatpush.bf16.msra.mxu0 %v1112
    %1723 = vmatpush.bf16.msra.mxu0 %v1109
    %1724 = vmatmul.bf16.gmra.mxu0 %v419
    %v1725 = vpop.f32.mrf.mxu0
    %v1726 = vadd.f32 %v1677, %v1725
    %v1727 = vpop.f32.mrf.mxu0
    %v1728 = vadd.f32 %v1679, %v1727
    %1729 = vmatmul.bf16.gmra.mxu0 %v423
    %v1730 = vpop.f32.mrf.mxu0
    %v1731 = vadd.f32 %v1682, %v1730
    %v1732 = vpop.f32.mrf.mxu0
    %v1733 = vadd.f32 %v1684, %v1732
    %1734 = vmatmul.bf16.gmra.mxu0 %v427
    %v1735 = vpop.f32.mrf.mxu0
    %v1736 = vadd.f32 %v1687, %v1735
    %v1737 = vpop.f32.mrf.mxu0
    %v1738 = vadd.f32 %v1689, %v1737
    %1739 = vmatmul.bf16.gmra.mxu0 %v431
    %v1740 = vpop.f32.mrf.mxu0
    %v1741 = vadd.f32 %v1692, %v1740
    %v1742 = vpop.f32.mrf.mxu0
    %v1743 = vadd.f32 %v1694, %v1742
    %1744 = vmatmul.bf16.gmra.mxu0 %v435
    %v1745 = vpop.f32.mrf.mxu0
    %v1746 = vadd.f32 %v1697, %v1745
    %v1747 = vpop.f32.mrf.mxu0
    %v1748 = vadd.f32 %v1699, %v1747
    %1749 = vmatmul.bf16.gmra.mxu0 %v439
    %v1750 = vpop.f32.mrf.mxu0
    %v1751 = vadd.f32 %v1702, %v1750
    %v1752 = vpop.f32.mrf.mxu0
    %v1753 = vadd.f32 %v1704, %v1752
    %1754 = vmatmul.bf16.gmra.mxu0 %v443
    %v1755 = vpop.f32.mrf.mxu0
    %v1756 = vadd.f32 %v1707, %v1755
    %v1757 = vpop.f32.mrf.mxu0
    %v1758 = vadd.f32 %v1709, %v1757
    %1759 = vmatmul.bf16.gmra.mxu0 %v447
    %v1760 = vpop.f32.mrf.mxu0
    %v1761 = vadd.f32 %v1712, %v1760
    %v1762 = vpop.f32.mrf.mxu0
    %v1763 = vadd.f32 %v1714, %v1762
    %1764 = vdwg.mxu0
    %1765 = vmatpush.bf16.msra.mxu0 %v1154
    %1766 = vmatpush.bf16.msra.mxu0 %v1151
    %1767 = vmatpush.bf16.msra.mxu0 %v1148
    %1768 = vmatpush.bf16.msra.mxu0 %v1145
    %1769 = vmatpush.bf16.msra.mxu0 %v1142
    %1770 = vmatpush.bf16.msra.mxu0 %v1139
    %1771 = vmatpush.bf16.msra.mxu0 %v1136
    %1772 = vmatpush.bf16.msra.mxu0 %v1133
    %1773 = vmatmul.bf16.gmra.mxu0 %v420
    %v1774 = vpop.f32.mrf.mxu0
    %v1775 = vadd.f32 %v1726, %v1774
    %v1776 = vpop.f32.mrf.mxu0
    %v1777 = vadd.f32 %v1728, %v1776
    %1778 = vmatmul.bf16.gmra.mxu0 %v424
    %v1779 = vpop.f32.mrf.mxu0
    %v1780 = vadd.f32 %v1731, %v1779
    %v1781 = vpop.f32.mrf.mxu0
    %v1782 = vadd.f32 %v1733, %v1781
    %1783 = vmatmul.bf16.gmra.mxu0 %v428
    %v1784 = vpop.f32.mrf.mxu0
    %v1785 = vadd.f32 %v1736, %v1784
    %v1786 = vpop.f32.mrf.mxu0
    %v1787 = vadd.f32 %v1738, %v1786
    %1788 = vmatmul.bf16.gmra.mxu0 %v432
    %v1789 = vpop.f32.mrf.mxu0
    %v1790 = vadd.f32 %v1741, %v1789
    %v1791 = vpop.f32.mrf.mxu0
    %v1792 = vadd.f32 %v1743, %v1791
    %1793 = vmatmul.bf16.gmra.mxu0 %v436
    %v1794 = vpop.f32.mrf.mxu0
    %v1795 = vadd.f32 %v1746, %v1794
    %v1796 = vpop.f32.mrf.mxu0
    %v1797 = vadd.f32 %v1748, %v1796
    %1798 = vmatmul.bf16.gmra.mxu0 %v440
    %v1799 = vpop.f32.mrf.mxu0
    %v1800 = vadd.f32 %v1751, %v1799
    %v1801 = vpop.f32.mrf.mxu0
    %v1802 = vadd.f32 %v1753, %v1801
    %1803 = vmatmul.bf16.gmra.mxu0 %v444
    %v1804 = vpop.f32.mrf.mxu0
    %v1805 = vadd.f32 %v1756, %v1804
    %v1806 = vpop.f32.mrf.mxu0
    %v1807 = vadd.f32 %v1758, %v1806
    %1808 = vmatmul.bf16.gmra.mxu0 %v448
    %v1809 = vpop.f32.mrf.mxu0
    %v1810 = vadd.f32 %v1761, %v1809
    %v1811 = vpop.f32.mrf.mxu0
    %v1812 = vadd.f32 %v1763, %v1811
    %1813 = vdwg.mxu0
    %1814 = vmatpush.bf16.msra.mxu0 %v1178
    %1815 = vmatpush.bf16.msra.mxu0 %v1175
    %1816 = vmatpush.bf16.msra.mxu0 %v1172
    %1817 = vmatpush.bf16.msra.mxu0 %v1169
    %1818 = vmatpush.bf16.msra.mxu0 %v1166
    %1819 = vmatpush.bf16.msra.mxu0 %v1163
    %1820 = vmatpush.bf16.msra.mxu0 %v1160
    %1821 = vmatpush.bf16.msra.mxu0 %v1157
    %1822 = vmatmul.bf16.gmra.mxu0 %v421
    %v1823 = vpop.f32.mrf.mxu0
    %v1824 = vadd.f32 %v1775, %v1823
    %v1825 = vpop.f32.mrf.mxu0
    %v1826 = vadd.f32 %v1777, %v1825
    %1827 = vmatmul.bf16.gmra.mxu0 %v425
    %v1828 = vpop.f32.mrf.mxu0
    %v1829 = vadd.f32 %v1780, %v1828
    %v1830 = vpop.f32.mrf.mxu0
    %v1831 = vadd.f32 %v1782, %v1830
    %1832 = vmatmul.bf16.gmra.mxu0 %v429
    %v1833 = vpop.f32.mrf.mxu0
    %v1834 = vadd.f32 %v1785, %v1833
    %v1835 = vpop.f32.mrf.mxu0
    %v1836 = vadd.f32 %v1787, %v1835
    %1837 = vmatmul.bf16.gmra.mxu0 %v433
    %v1838 = vpop.f32.mrf.mxu0
    %v1839 = vadd.f32 %v1790, %v1838
    %v1840 = vpop.f32.mrf.mxu0
    %v1841 = vadd.f32 %v1792, %v1840
    %1842 = vmatmul.bf16.gmra.mxu0 %v437
    %v1843 = vpop.f32.mrf.mxu0
    %v1844 = vadd.f32 %v1795, %v1843
    %v1845 = vpop.f32.mrf.mxu0
    %v1846 = vadd.f32 %v1797, %v1845
    %1847 = vmatmul.bf16.gmra.mxu0 %v441
    %v1848 = vpop.f32.mrf.mxu0
    %v1849 = vadd.f32 %v1800, %v1848
    %v1850 = vpop.f32.mrf.mxu0
    %v1851 = vadd.f32 %v1802, %v1850
    %1852 = vmatmul.bf16.gmra.mxu0 %v445
    %v1853 = vpop.f32.mrf.mxu0
    %v1854 = vadd.f32 %v1805, %v1853
    %v1855 = vpop.f32.mrf.mxu0
    %v1856 = vadd.f32 %v1807, %v1855
    %1857 = vmatmul.bf16.gmra.mxu0 %v449
    %v1858 = vpop.f32.mrf.mxu0
    %v1859 = vadd.f32 %v1810, %v1858
    %v1860 = vpop.f32.mrf.mxu0
    %v1861 = vadd.f32 %v1812, %v1860
    %1862 = vdwg.mxu0
    %v1863 = vld [vmem:[%s6] sm:$0x7]
    %v1865 = vperm.slane %v1863, 0
    %v1866 = vperm.slane %v1863, 1
    %v1867 = vperm.slane %v1863, 2
    %v1871 = vadd.f32 %v1432, %v1865
    %v1872 = vadd.f32 %v1628, %v1866
    %v1873 = vadd.f32 %v1824, %v1867
    %v1874 = vadd.f32 %v1434, %v1865
    %v1875 = vadd.f32 %v1630, %v1866
    %v1876 = vadd.f32 %v1826, %v1867
    %v1877 = vadd.f32 %v1437, %v1865
    %v1878 = vadd.f32 %v1633, %v1866
    %v1879 = vadd.f32 %v1829, %v1867
    %v1880 = vadd.f32 %v1439, %v1865
    %v1881 = vadd.f32 %v1635, %v1866
    %v1882 = vadd.f32 %v1831, %v1867
    %v1883 = vadd.f32 %v1442, %v1865
    %v1884 = vadd.f32 %v1638, %v1866
    %v1885 = vadd.f32 %v1834, %v1867
    %v1886 = vadd.f32 %v1444, %v1865
    %v1887 = vadd.f32 %v1640, %v1866
    %v1888 = vadd.f32 %v1836, %v1867
    %v1889 = vadd.f32 %v1447, %v1865
    %v1890 = vadd.f32 %v1643, %v1866
    %v1891 = vadd.f32 %v1839, %v1867
    %v1892 = vadd.f32 %v1449, %v1865
    %v1893 = vadd.f32 %v1645, %v1866
    %v1894 = vadd.f32 %v1841, %v1867
    %v1895 = vadd.f32 %v1452, %v1865
    %v1896 = vadd.f32 %v1648, %v1866
    %v1897 = vadd.f32 %v1844, %v1867
    %v1898 = vadd.f32 %v1454, %v1865
    %v1899 = vadd.f32 %v1650, %v1866
    %v1900 = vadd.f32 %v1846, %v1867
    %v1901 = vadd.f32 %v1457, %v1865
    %v1902 = vadd.f32 %v1653, %v1866
    %v1903 = vadd.f32 %v1849, %v1867
    %v1904 = vadd.f32 %v1459, %v1865
    %v1905 = vadd.f32 %v1655, %v1866
    %v1906 = vadd.f32 %v1851, %v1867
    %v1907 = vadd.f32 %v1462, %v1865
    %v1908 = vadd.f32 %v1658, %v1866
    %v1909 = vadd.f32 %v1854, %v1867
    %v1910 = vadd.f32 %v1464, %v1865
    %v1911 = vadd.f32 %v1660, %v1866
    %v1912 = vadd.f32 %v1856, %v1867
    %v1913 = vadd.f32 %v1467, %v1865
    %v1914 = vadd.f32 %v1663, %v1866
    %v1915 = vadd.f32 %v1859, %v1867
    %v1916 = vadd.f32 %v1469, %v1865
    %v1917 = vadd.f32 %v1665, %v1866
    %v1918 = vadd.f32 %v1861, %v1867
    %v1919 = vmax.f32 %v1871, 0.0
    %v1920 = vmax.f32 %v1872, 0.0
    %v1921 = vmax.f32 %v1873, 0.0
    %v1922 = vmax.f32 %v1874, 0.0
    %v1923 = vmax.f32 %v1875, 0.0
    %v1924 = vmax.f32 %v1876, 0.0
    %v1925 = vmax.f32 %v1877, 0.0
    %v1926 = vmax.f32 %v1878, 0.0
    %v1927 = vmax.f32 %v1879, 0.0
    %v1928 = vmax.f32 %v1880, 0.0
    %v1929 = vmax.f32 %v1881, 0.0
    %v1930 = vmax.f32 %v1882, 0.0
    %v1931 = vmax.f32 %v1883, 0.0
    %v1932 = vmax.f32 %v1884, 0.0
    %v1933 = vmax.f32 %v1885, 0.0
    %v1934 = vmax.f32 %v1886, 0.0
    %v1935 = vmax.f32 %v1887, 0.0
    %v1936 = vmax.f32 %v1888, 0.0
    %v1937 = vmax.f32 %v1889, 0.0
    %v1938 = vmax.f32 %v1890, 0.0
    %v1939 = vmax.f32 %v1891, 0.0
    %v1940 = vmax.f32 %v1892, 0.0
    %v1941 = vmax.f32 %v1893, 0.0
    %v1942 = vmax.f32 %v1894, 0.0
    %v1943 = vmax.f32 %v1895, 0.0
    %v1944 = vmax.f32 %v1896, 0.0
    %v1945 = vmax.f32 %v1897, 0.0
    %v1946 = vmax.f32 %v1898, 0.0
    %v1947 = vmax.f32 %v1899, 0.0
    %v1948 = vmax.f32 %v1900, 0.0
    %v1949 = vmax.f32 %v1901, 0.0
    %v1950 = vmax.f32 %v1902, 0.0
    %v1951 = vmax.f32 %v1903, 0.0
    %v1952 = vmax.f32 %v1904, 0.0
    %v1953 = vmax.f32 %v1905, 0.0
    %v1954 = vmax.f32 %v1906, 0.0
    %v1955 = vmax.f32 %v1907, 0.0
    %v1956 = vmax.f32 %v1908, 0.0
    %v1957 = vmax.f32 %v1909, 0.0
    %v1958 = vmax.f32 %v1910, 0.0
    %v1959 = vmax.f32 %v1911, 0.0
    %v1960 = vmax.f32 %v1912, 0.0
    %v1961 = vmax.f32 %v1913, 0.0
    %v1962 = vmax.f32 %v1914, 0.0
    %v1963 = vmax.f32 %v1915, 0.0
    %v1964 = vmax.f32 %v1916, 0.0
    %v1965 = vmax.f32 %v1917, 0.0
    %v1966 = vmax.f32 %v1918, 0.0
    %v1967 = vld [vmem:[%s7] sm:$0x7]
    %v1969 = vperm.slane %v1967, 0
    %v1970 = vperm.slane %v1967, 1
    %v1971 = vperm.slane %v1967, 2
    %v1975 = vmul.f32 %v1919, %v1969
    %v1976 = vmul.f32 %v1920, %v1970
    %v1977 = vmul.f32 %v1921, %v1971
    %v1978 = vmul.f32 %v1922, %v1969
    %v1979 = vmul.f32 %v1923, %v1970
    %v1980 = vmul.f32 %v1924, %v1971
    %v1981 = vmul.f32 %v1925, %v1969
    %v1982 = vmul.f32 %v1926, %v1970
    %v1983 = vmul.f32 %v1927, %v1971
    %v1984 = vmul.f32 %v1928, %v1969
    %v1985 = vmul.f32 %v1929, %v1970
    %v1986 = vmul.f32 %v1930, %v1971
    %v1987 = vmul.f32 %v1931, %v1969
    %v1988 = vmul.f32 %v1932, %v1970
    %v1989 = vmul.f32 %v1933, %v1971
    %v1990 = vmul.f32 %v1934, %v1969
    %v1991 = vmul.f32 %v1935, %v1970
    %v1992 = vmul.f32 %v1936, %v1971
    %v1993 = vmul.f32 %v1937, %v1969
    %v1994 = vmul.f32 %v1938, %v1970
    %v1995 = vmul.f32 %v1939, %v1971
    %v1996 = vmul.f32 %v1940, %v1969
    %v1997 = vmul.f32 %v1941, %v1970
    %v1998 = vmul.f32 %v1942, %v1971
    %v1999 = vmul.f32 %v1943, %v1969
    %v2000 = vmul.f32 %v1944, %v1970
    %v2001 = vmul.f32 %v1945, %v1971
    %v2002 = vmul.f32 %v1946, %v1969
    %v2003 = vmul.f32 %v1947, %v1970
    %v2004 = vmul.f32 %v1948, %v1971
    %v2005 = vmul.f32 %v1949, %v1969
    %v2006 = vmul.f32 %v1950, %v1970
    %v2007 = vmul.f32 %v1951, %v1971
    %v2008 = vmul.f32 %v1952, %v1969
    %v2009 = vmul.f32 %v1953, %v1970
    %v2010 = vmul.f32 %v1954, %v1971
    %v2011 = vmul.f32 %v1955, %v1969
    %v2012 = vmul.f32 %v1956, %v1970
    %v2013 = vmul.f32 %v1957, %v1971
    %v2014 = vmul.f32 %v1958, %v1969
    %v2015 = vmul.f32 %v1959, %v1970
    %v2016 = vmul.f32 %v1960, %v1971
    %v2017 = vmul.f32 %v1961, %v1969
    %v2018 = vmul.f32 %v1962, %v1970
    %v2019 = vmul.f32 %v1963, %v1971
    %v2020 = vmul.f32 %v1964, %v1969
    %v2021 = vmul.f32 %v1965, %v1970
    %v2022 = vmul.f32 %v1966, %v1971
    %v2023 = vadd.f32 %v1975, %v1976
    %v2024 = vadd.f32 %v1978, %v1979
    %v2025 = vadd.f32 %v1981, %v1982
    %v2026 = vadd.f32 %v1984, %v1985
    %v2027 = vadd.f32 %v1987, %v1988
    %v2028 = vadd.f32 %v1990, %v1991
    %v2029 = vadd.f32 %v1993, %v1994
    %v2030 = vadd.f32 %v1996, %v1997
    %v2031 = vadd.f32 %v1999, %v2000
    %v2032 = vadd.f32 %v2002, %v2003
    %v2033 = vadd.f32 %v2005, %v2006
    %v2034 = vadd.f32 %v2008, %v2009
    %v2035 = vadd.f32 %v2011, %v2012
    %v2036 = vadd.f32 %v2014, %v2015
    %v2037 = vadd.f32 %v2017, %v2018
    %v2038 = vadd.f32 %v2020, %v2021
    %v2039 = vadd.f32 %v2023, %v1977
    %v2040 = vadd.f32 %v2024, %v1980
    %v2041 = vadd.f32 %v2025, %v1983
    %v2042 = vadd.f32 %v2026, %v1986
    %v2043 = vadd.f32 %v2027, %v1989
    %v2044 = vadd.f32 %v2028, %v1992
    %v2045 = vadd.f32 %v2029, %v1995
    %v2046 = vadd.f32 %v2030, %v1998
    %v2047 = vadd.f32 %v2031, %v2001
    %v2048 = vadd.f32 %v2032, %v2004
    %v2049 = vadd.f32 %v2033, %v2007
    %v2050 = vadd.f32 %v2034, %v2010
    %v2051 = vadd.f32 %v2035, %v2013
    %v2052 = vadd.f32 %v2036, %v2016
    %v2053 = vadd.f32 %v2037, %v2019
    %v2054 = vadd.f32 %v2038, %v2022
    %2055 = vxpose.xlu0.b32.start [1/16] %v2039, 128
    %2056 = vxpose.xlu0.b32.cont [2/16] %v2040, 128
    %2057 = vxpose.xlu0.b32.cont [3/16] %v2041, 128
    %2058 = vxpose.xlu0.b32.cont [4/16] %v2042, 128
    %2059 = vxpose.xlu0.b32.cont [5/16] %v2043, 128
    %2060 = vxpose.xlu0.b32.cont [6/16] %v2044, 128
    %2061 = vxpose.xlu0.b32.cont [7/16] %v2045, 128
    %2062 = vxpose.xlu0.b32.cont [8/16] %v2046, 128
    %2063 = vxpose.xlu0.b32.cont [9/16] %v2047, 128
    %2064 = vxpose.xlu0.b32.cont [10/16] %v2048, 128
    %2065 = vxpose.xlu0.b32.cont [11/16] %v2049, 128
    %2066 = vxpose.xlu0.b32.cont [12/16] %v2050, 128
    %2067 = vxpose.xlu0.b32.cont [13/16] %v2051, 128
    %2068 = vxpose.xlu0.b32.cont [14/16] %v2052, 128
    %2069 = vxpose.xlu0.b32.cont [15/16] %v2053, 128
    %2070 = vxpose.xlu0.b32.end [16/16] %v2054, 128
    %v2071 = vpop.trf.xlu0
    %v2072 = vpop.trf.xlu0
    %v2073 = vpop.trf.xlu0
    %v2074 = vpop.trf.xlu0
    %v2075 = vpop.trf.xlu0
    %v2076 = vpop.trf.xlu0
    %v2077 = vpop.trf.xlu0
    %v2078 = vpop.trf.xlu0
    %v2079 = vpop.trf.xlu0
    %v2080 = vpop.trf.xlu0
    %v2081 = vpop.trf.xlu0
    %v2082 = vpop.trf.xlu0
    %v2083 = vpop.trf.xlu0
    %v2084 = vpop.trf.xlu0
    %v2085 = vpop.trf.xlu0
    %v2086 = vpop.trf.xlu0
    %v2087 = vadd.f32 %v2071, %v2072
    %v2088 = vadd.f32 %v2087, %v2073
    %v2089 = vadd.f32 %v2088, %v2074
    %v2090 = vadd.f32 %v2089, %v2075
    %v2091 = vadd.f32 %v2090, %v2076
    %v2092 = vadd.f32 %v2091, %v2077
    %v2093 = vadd.f32 %v2092, %v2078
    %v2094 = vadd.f32 %v2093, %v2079
    %v2095 = vadd.f32 %v2094, %v2080
    %v2096 = vadd.f32 %v2095, %v2081
    %v2097 = vadd.f32 %v2096, %v2082
    %v2098 = vadd.f32 %v2097, %v2083
    %v2099 = vadd.f32 %v2098, %v2084
    %v2100 = vadd.f32 %v2099, %v2085
    %v2101 = vadd.f32 %v2100, %v2086
    %v2102 = vrot.slane %v2101, 4
    %v2103 = vadd.f32 %v2101, %v2102
    %v2104 = vrot.slane %v2103, 2
    %v2105 = vadd.f32 %v2103, %v2104
    %v2106 = vrot.slane %v2105, 1
    %v2107 = vadd.f32 %v2105, %v2106
    %s2108 = sld [smem:[#allocation2]]
    %v2109 = vstv %s2108
    %v2110 = vadd.f32 %v2107, %v2109
    %2111 = vst [vmem:[#allocation6] sm:$0x1] %v2110
    // Predicated region
    $region42: #{tpu_custom_call.1} parent=1 // pred_check
      _
    $region43: #{tpu_custom_call.1} parent=1 // pred_check_branch
      %2113 = sbr.rel (0) target = $region45
    $region44: #{tpu_custom_call.1} parent=1 // pred_region
      %2115 = vsyncadd [#allocation5], 0
      %s2117 = sshll.u32 [#allocation6], 4
      %s2118 = int_to_ptr.vmem [resolvable:$true] %s2117
      %s2119 = sshll.u32 %s9, 4
      %s2120 = int_to_ptr.hbm [resolvable:$true] %s2119
      %2122 = dma.vmem_to_hbm [thread:$0]  %s2118, 16, %s2120, [#allocation5]
    $region45: #{tpu_custom_call.1} parent=1 // pred_fallthru
      _
    // Predicated region
    $region46: #{tpu_custom_call.1} parent=1 // pred_check
      _
    $region47: #{tpu_custom_call.1} parent=1 // pred_check_branch
      %2124 = sbr.rel (0) target = $region49
    $region48: #{tpu_custom_call.1} parent=1 // pred_region
      %2126 = dma.done [#allocation5], 16
    $region49: #{tpu_custom_call.1} parent=1 // pred_fallthru
      _
    %2127 = vsyncpa [#allocation4], 1
    %2128 = vsyncpa [#allocation5], 1

</llo_original>
